<compile_context>
chip_gen: v6e
topology: v6e:2x2x1
jax: 0.10.0
libtpu: 0.0.40
codegen_flags: <defaults>
</compile_context>

<pallas_src>
import functools

import jax
import jax.numpy as jnp
from jax.experimental import pallas as pl
from jax.experimental.pallas import tpu as pltpu

# ----------------------------- model sizes ---------------------------------
BATCH       = 8
VOCAB       = 128
BERT_DIM    = 1024
EMB_DIM     = 32     # words_emb_dim
N_TOPICS    = 16
N_LABELS    = 4
BN_EPS      = 1e-3

MISC_LANES  = 128    # lane-dense combined output slab width

# row offsets inside the packed (8, 128) "vector params" slab
_ROW_B_ADAPT   = 0   # (V,)
_ROW_B_BETA    = 1   # (V,)
_ROW_B_ML      = 2   # [b_mean | b_logvar]   lanes 0:2T
_ROW_B_CLS0    = 3   # lanes 0:T
_ROW_B_CLS1    = 4   # lanes 0:L
_ROW_PR_MEAN   = 5   # lanes 0:T
_ROW_PR_LOGVAR = 6   # lanes 0:T
_ROW_PR_INVVAR = 7   # lanes 0:T  (1 / exp(prior_logvar), precomputed)

# row offsets inside the packed (72, 128) "small weights" slab
_R_WML0, _R_WML1   = 0, EMB_DIM + N_LABELS        # (E+L, 2T)   = [w_mean | w_logvar]
_R_WC0_0, _R_WC0_1 = 40, 40 + N_TOPICS            # (T, T)      classifier_layer_0
_R_WC1_0, _R_WC1_1 = 56, 56 + N_TOPICS            # (T, L)      classifier_layer_1
SMALL_W_ROWS = 72


def _softmax_lastdim(v):
    m = jnp.max(v, axis=-1, keepdims=True)
    e = jnp.exp(v - m)
    return e * pl.reciprocal(jnp.sum(e, axis=-1, keepdims=True), approx=True)


def _batchnorm(v):
    # BatchNorm1d, training statistics, gamma=1, beta=0, eps=1e-3 (biased var).
    mu = jnp.mean(v, axis=0, keepdims=True)
    var = jnp.mean((v - mu) * (v - mu), axis=0, keepdims=True)
    return (v - mu) * jax.lax.rsqrt(var + BN_EPS)


def _softplus(v):
    return jnp.logaddexp(v, 0.0)


def scholar_kernel(
    # data
    x_tfidf_ref, bert_ref, y_ref, eps_ref,
    # weights
    w_adapt_ref,          # (BERT_DIM, V) bf16
    w_emb_ref,            # (2V, E)       f32
    w_beta_ref,           # (T, V)        f32
    vec_ref,              # (8, 128)      f32  packed biases / priors
    small_ref,            # (72, 128)     f32  packed small weights
    # outputs
    xrecon_out_ref,       # (B, V)
    misc_out_ref,         # (B, 128): [theta | y_recon | loss | NL | KLD | 0...]
    *, eta_bn_prop, var_scale,
):
    T, L, V = N_TOPICS, N_LABELS, VOCAB

    X   = x_tfidf_ref[...]
    Y   = y_ref[...]
    eps = eps_ref[...]
    B   = X.shape[0]

    # ---- adapt_bert (bf16 weights / input, f32 accumulation) --------------
    x_bert = jnp.dot(bert_ref[...], w_adapt_ref[...],
                     preferred_element_type=jnp.float32)
    x_bert = x_bert + vec_ref[_ROW_B_ADAPT:_ROW_B_ADAPT + 1, 0:V]

    # ---- embeddings_x_layer: single K = 2V matmul (bias=False) ------------
    xcat = jnp.concatenate([X, x_bert], axis=1)                   # (B, 2V)
    en0_x = jnp.dot(xcat, w_emb_ref[...], preferred_element_type=jnp.float32)

    # encoder_output = softplus(cat(en0_x, Y)); dropout = identity (eval)
    en0 = jnp.concatenate([en0_x, Y], axis=1)                     # (B, E+L)
    enc = _softplus(en0)

    # ---- fused mean/logvar projection: one (E+L, 2T) matmul ---------------
    w_ml = small_ref[_R_WML0:_R_WML1, 0:2 * T]                    # (E+L, 2T)
    post_ml = jnp.dot(enc, w_ml, preferred_element_type=jnp.float32)
    post_ml = post_ml + vec_ref[_ROW_B_ML:_ROW_B_ML + 1, 0:2 * T]
    post_mean   = post_ml[:, 0:T]
    post_logvar = post_ml[:, T:2 * T]

    mean_bn   = _batchnorm(post_mean)
    logvar_bn = _batchnorm(post_logvar)

    # reparameterization; z_dropout = identity (eval)
    sigma    = jnp.exp(0.5 * logvar_bn)        # == sqrt(exp(logvar_bn))
    post_var = sigma * sigma                   # == exp(logvar_bn)
    z = mean_bn + sigma * eps * var_scale
    theta = _softmax_lastdim(z)

    # ---- decoder -----------------------------------------------------------
    eta = jnp.dot(theta, w_beta_ref[...], preferred_element_type=jnp.float32)
    eta = eta + vec_ref[_ROW_B_BETA:_ROW_B_BETA + 1, 0:V]
    eta_bn = _batchnorm(eta)

    m_x = jnp.max(eta_bn, axis=-1, keepdims=True)
    e_x = jnp.exp(eta_bn - m_x)
    s_x = jnp.sum(e_x, axis=-1, keepdims=True)
    x_recon_bn = e_x * pl.reciprocal(s_x, approx=True)

    if eta_bn_prop == 1.0:
        # blend is a no-op: skip the no-BN softmax; NL from log-softmax.
        x_recon = x_recon_bn
        log_x_recon = (eta_bn - m_x) - jnp.log(s_x)
    else:
        x_recon_no_bn = _softmax_lastdim(eta)
        x_recon = eta_bn_prop * x_recon_bn + (1.0 - eta_bn_prop) * x_recon_no_bn
        log_x_recon = jnp.log(x_recon + 1e-10)

    # ---- classifier (classifier_layers == 1, classify_from_covars=False) ---
    w_cls0 = small_ref[_R_WC0_0:_R_WC0_1, 0:T]
    w_cls1 = small_ref[_R_WC1_0:_R_WC1_1, 0:L]
    cls0 = (jnp.dot(theta, w_cls0, preferred_element_type=jnp.float32)
            + vec_ref[_ROW_B_CLS0:_ROW_B_CLS0 + 1, 0:T])
    cls1 = (jnp.dot(_softplus(cls0), w_cls1, preferred_element_type=jnp.float32)
            + vec_ref[_ROW_B_CLS1:_ROW_B_CLS1 + 1, 0:L])
    m_y = jnp.max(cls1, axis=-1, keepdims=True)
    e_y = jnp.exp(cls1 - m_y)
    s_y = jnp.sum(e_y, axis=-1, keepdims=True)
    y_recon = e_y * pl.reciprocal(s_y, approx=True)
    log_y_recon = (cls1 - m_y) - jnp.log(s_y)

    # ---- loss ---------------------------------------------------------------
    NL = -jnp.sum(X * log_x_recon, axis=1, keepdims=True)           # [B,1]
    NL = NL - jnp.sum(Y * log_y_recon, axis=1, keepdims=True)

    prior_mean    = vec_ref[_ROW_PR_MEAN:_ROW_PR_MEAN + 1, 0:T]     # [1,T]
    prior_logvar  = vec_ref[_ROW_PR_LOGVAR:_ROW_PR_LOGVAR + 1, 0:T]
    prior_inv_var = vec_ref[_ROW_PR_INVVAR:_ROW_PR_INVVAR + 1, 0:T]

    diff = mean_bn - prior_mean
    KLD = 0.5 * (jnp.sum(post_var * prior_inv_var
                         + diff * diff * prior_inv_var
                         + (prior_logvar - logvar_bn),
                         axis=1, keepdims=True) - T)                # [B,1]

    loss = NL + KLD   # contrastive_loss == 0 (ablation=None)

    # ---- outputs (single lane-dense slab + lane-dense x_recon) --------------
    xrecon_out_ref[...] = x_recon
    pad = jnp.zeros((B, MISC_LANES - (T + L + 3)), jnp.float32)
    misc_out_ref[...] = jnp.concatenate(
        [theta, y_recon, loss, NL, KLD, pad], axis=1)


def scholar_forward(packed, X_tfidf, bert_emb, Y, eps,
                    eta_bn_prop=1.0, var_scale=1.0):
    B, V = X_tfidf.shape
    T = N_TOPICS
    L = Y.shape[1]

    kernel = functools.partial(scholar_kernel,
                               eta_bn_prop=float(eta_bn_prop),
                               var_scale=float(var_scale))

    inputs = (
        X_tfidf.astype(jnp.float32),
        bert_emb.astype(jnp.bfloat16),      # bf16 feed for the bf16 MXU
        Y.astype(jnp.float32),
        eps.astype(jnp.float32),
        packed["w_adapt_bf16"],
        packed["w_emb"],
        packed["w_beta"],
        packed["vec_params"],
        packed["small_w"],
    )

    vmem = pl.BlockSpec(memory_space=pltpu.MemorySpace.VMEM)

    x_recon, misc = pl.pallas_call(
        kernel,
        out_shape=(
            jax.ShapeDtypeStruct((B, V), jnp.float32),
            jax.ShapeDtypeStruct((B, MISC_LANES), jnp.float32),
        ),
        in_specs=[vmem] * len(inputs),
        out_specs=(vmem, vmem),
    )(*inputs)

    theta    = misc[:, 0:T]
    y_recon  = misc[:, T:T + L]
    loss_row = misc[:, T + L]
    nl_row   = misc[:, T + L + 1]
    kld_row  = misc[:, T + L + 2]
    # do_average=True: means over the batch; contrastive_loss.mean() == 0.
    loss_stats = jnp.stack([loss_row.mean(), nl_row.mean(), kld_row.mean(),
                            jnp.zeros((), jnp.float32)]).reshape(1, 4)
    return theta, x_recon, y_recon, loss_stats


# ------------------------- deterministic parameters -------------------------
def init_params(key):
    def dense(k, shape, scale):
        return jax.random.uniform(k, shape, jnp.float32, -1.0, 1.0) * scale

    ks = jax.random.split(key, 12)
    V, E, T, L, Bd = VOCAB, EMB_DIM, N_TOPICS, N_LABELS, BERT_DIM

    # xavier-like scales (exact values irrelevant; deterministic)
    w_adapt = dense(ks[0], (Bd, V), (6.0 / (Bd + V)) ** 0.5)
    b_adapt = jnp.zeros((1, V), jnp.float32)

    w_emb = dense(ks[1], (2 * V, E), (6.0 / (2 * V + E)) ** 0.5)

    emb_size = E + L
    w_mean = dense(ks[2], (emb_size, T), (6.0 / (emb_size + T)) ** 0.5)
    b_mean = jnp.zeros((1, T), jnp.float32)
    w_logvar = dense(ks[3], (emb_size, T), (6.0 / (emb_size + T)) ** 0.5)
    b_logvar = jnp.zeros((1, T), jnp.float32)

    w_beta = dense(ks[4], (T, V), (6.0 / (T + V)) ** 0.5)
    b_beta = jnp.zeros((1, V), jnp.float32)

    w_cls0 = dense(ks[5], (T, T), (6.0 / (2 * T)) ** 0.5)
    b_cls0 = jnp.zeros((1, T), jnp.float32)
    w_cls1 = dense(ks[6], (T, L), (6.0 / (T + L)) ** 0.5)
    b_cls1 = jnp.zeros((1, L), jnp.float32)

    # prior from a symmetric Dirichlet alpha = 0.5 (as in __init__)
    alpha = jnp.full((1, T), 0.5, jnp.float32)
    log_alpha = jnp.log(alpha)
    prior_mean = (log_alpha.T - jnp.mean(log_alpha, axis=1)).T
    prior_var = ((1.0 / alpha * (1.0 - 2.0 / T)).T
                 + 1.0 / (T * T) * jnp.sum(1.0 / alpha, axis=1)).T
    prior_logvar = jnp.log(prior_var)

    return dict(
        w_adapt=w_adapt, b_adapt=b_adapt,
        w_emb=w_emb,
        w_mean=w_mean, b_mean=b_mean,
        w_logvar=w_logvar, b_logvar=b_logvar,
        w_beta=w_beta, b_beta=b_beta,
        w_cls0=w_cls0, b_cls0=b_cls0,
        w_cls1=w_cls1, b_cls1=b_cls1,
        prior_mean=prior_mean.astype(jnp.float32),
        prior_logvar=prior_logvar.astype(jnp.float32),
    )


def pack_params(p):
    """Pack small params into two lane-padded slabs; cast w_adapt to bf16."""
    V, E, T, L = VOCAB, EMB_DIM, N_TOPICS, N_LABELS

    vec = jnp.zeros((8, 128), jnp.float32)
    vec = vec.at[_ROW_B_ADAPT, :V].set(p["b_adapt"][0])
    vec = vec.at[_ROW_B_BETA, :V].set(p["b_beta"][0])
    vec = vec.at[_ROW_B_ML, :2 * T].set(
        jnp.concatenate([p["b_mean"][0], p["b_logvar"][0]]))
    vec = vec.at[_ROW_B_CLS0, :T].set(p["b_cls0"][0])
    vec = vec.at[_ROW_B_CLS1, :L].set(p["b_cls1"][0])
    vec = vec.at[_ROW_PR_MEAN, :T].set(p["prior_mean"][0])
    vec = vec.at[_ROW_PR_LOGVAR, :T].set(p["prior_logvar"][0])
    vec = vec.at[_ROW_PR_INVVAR, :T].set(1.0 / jnp.exp(p["prior_logvar"][0]))

    sw = jnp.zeros((SMALL_W_ROWS, 128), jnp.float32)
    w_ml = jnp.concatenate([p["w_mean"], p["w_logvar"]], axis=1)   # (E+L, 2T)
    sw = sw.at[_R_WML0:_R_WML1, :2 * T].set(w_ml)
    sw = sw.at[_R_WC0_0:_R_WC0_1, :T].set(p["w_cls0"])
    sw = sw.at[_R_WC1_0:_R_WC1_1, :L].set(p["w_cls1"])

    return dict(
        w_adapt_bf16=p["w_adapt"].astype(jnp.bfloat16),
        w_emb=p["w_emb"],
        w_beta=p["w_beta"],
        vec_params=vec,
        small_w=sw,
    )


if __name__ == "__main__":
    key = jax.random.PRNGKey(0)
    k_p, k_x, k_b, k_y, k_e = jax.random.split(key, 5)

    params = init_params(k_p)
    packed = pack_params(params)

    X_tfidf = jax.nn.relu(jax.random.normal(k_x, (BATCH, VOCAB), jnp.float32))
    bert_emb = jax.random.normal(k_b, (BATCH, BERT_DIM), jnp.float32)
    Y = jax.nn.one_hot(
        jax.random.randint(k_y, (BATCH,), 0, N_LABELS), N_LABELS).astype(jnp.float32)
    eps = jax.random.normal(k_e, (BATCH, N_TOPICS), jnp.float32)  # VAE noise

    theta, x_recon, y_recon, loss_stats = scholar_forward(
        packed, X_tfidf, bert_emb, Y, eps, eta_bn_prop=1.0, var_scale=1.0)

    jax.block_until_ready((theta, x_recon, y_recon, loss_stats))
    print("KERNEL_OK")
</pallas_src>

<mosaic_0001>
module attributes {stable_mosaic.version = 11 : i64} {
  func.func @scholar_kernel(%arg0: memref<8x128xf32, #tpu.memory_space<vmem>>, %arg1: memref<8x1024xbf16, #tpu.memory_space<vmem>>, %arg2: memref<8x4xf32, #tpu.memory_space<vmem>>, %arg3: memref<8x16xf32, #tpu.memory_space<vmem>>, %arg4: memref<1024x128xbf16, #tpu.memory_space<vmem>>, %arg5: memref<256x32xf32, #tpu.memory_space<vmem>>, %arg6: memref<16x128xf32, #tpu.memory_space<vmem>>, %arg7: memref<8x128xf32, #tpu.memory_space<vmem>>, %arg8: memref<72x128xf32, #tpu.memory_space<vmem>>, %arg9: memref<8x128xf32, #tpu.memory_space<vmem>>, %arg10: memref<8x128xf32, #tpu.memory_space<vmem>>) attributes {dimension_semantics = [], scalar_prefetch = 0 : i64, scratch_operands = 0 : i64, tpu.core_type = #tpu.core_type<tc>} {
    %c0 = arith.constant 0 : index
    %c0_0 = arith.constant 0 : index
    %0 = vector.load %arg0[%c0, %c0_0] : memref<8x128xf32, #tpu.memory_space<vmem>>, vector<8x128xf32>
    %c0_1 = arith.constant 0 : index
    %c0_2 = arith.constant 0 : index
    %1 = vector.load %arg2[%c0_1, %c0_2] : memref<8x4xf32, #tpu.memory_space<vmem>>, vector<8x4xf32>
    %c0_3 = arith.constant 0 : index
    %c0_4 = arith.constant 0 : index
    %2 = vector.load %arg3[%c0_3, %c0_4] : memref<8x16xf32, #tpu.memory_space<vmem>>, vector<8x16xf32>
    %c0_5 = arith.constant 0 : index
    %c0_6 = arith.constant 0 : index
    %3 = vector.load %arg1[%c0_5, %c0_6] : memref<8x1024xbf16, #tpu.memory_space<vmem>>, vector<8x1024xbf16>
    %c0_7 = arith.constant 0 : index
    %c0_8 = arith.constant 0 : index
    %4 = vector.load %arg4[%c0_7, %c0_8] : memref<1024x128xbf16, #tpu.memory_space<vmem>>, vector<1024x128xbf16>
    %cst = arith.constant dense<0.000000e+00> : vector<8x128xf32>
    %5 = tpu.matmul %3, %4, %cst {dimension_numbers = #tpu.dot_dimension_numbers<[1], [0], [0], [1], [0, 0, 1, 1], [], []>} : vector<8x1024xbf16>, vector<1024x128xbf16>, vector<8x128xf32> -> vector<8x128xf32>
    %c0_9 = arith.constant 0 : index
    %c0_10 = arith.constant 0 : index
    %6 = vector.load %arg7[%c0_9, %c0_10] : memref<8x128xf32, #tpu.memory_space<vmem>>, vector<1x128xf32>
    %7 = vector.broadcast %6 : vector<1x128xf32> to vector<8x128xf32>
    %8 = arith.addf %5, %7 : vector<8x128xf32>
    %9 = tpu.concatenate %0, %8 in 1 : vector<8x128xf32>, vector<8x128xf32> -> vector<8x256xf32>
    %c0_11 = arith.constant 0 : index
    %c0_12 = arith.constant 0 : index
    %10 = vector.load %arg5[%c0_11, %c0_12] : memref<256x32xf32, #tpu.memory_space<vmem>>, vector<256x32xf32>
    %cst_13 = arith.constant dense<0.000000e+00> : vector<8x32xf32>
    %11 = tpu.matmul %9, %10, %cst_13 {dimension_numbers = #tpu.dot_dimension_numbers<[1], [0], [0], [1], [0, 0, 1, 1], [], []>} : vector<8x256xf32>, vector<256x32xf32>, vector<8x32xf32> -> vector<8x32xf32>
    %12 = tpu.concatenate %11, %1 in 1 : vector<8x32xf32>, vector<8x4xf32> -> vector<8x36xf32>
    %cst_14 = arith.constant 0.000000e+00 : f32
    %13 = vector.broadcast %cst_14 : f32 to vector<8x36xf32>
    %14 = arith.maximumf %12, %13 : vector<8x36xf32>
    %15 = vector.broadcast %cst_14 : f32 to vector<8x36xf32>
    %16 = arith.subf %12, %15 : vector<8x36xf32>
    %17 = arith.cmpf one, %16, %16 : vector<8x36xf32>
    %18 = vector.broadcast %cst_14 : f32 to vector<8x36xf32>
    %19 = arith.addf %12, %18 : vector<8x36xf32>
    %20 = math.absf %16 : vector<8x36xf32>
    %cst_15 = arith.constant 0.000000e+00 : f32
    %21 = vector.broadcast %cst_15 : f32 to vector<8x36xf32>
    %22 = arith.subf %21, %20 : vector<8x36xf32>
    %23 = math.exp %22 : vector<8x36xf32>
    %24 = math.log1p %23 : vector<8x36xf32>
    %25 = arith.addf %14, %24 : vector<8x36xf32>
    %26 = arith.select %17, %19, %25 : vector<8x36xi1>, vector<8x36xf32>
    %c0_16 = arith.constant 0 : index
    %c0_17 = arith.constant 0 : index
    %27 = vector.load %arg8[%c0_16, %c0_17] : memref<72x128xf32, #tpu.memory_space<vmem>>, vector<36x32xf32>
    %cst_18 = arith.constant dense<0.000000e+00> : vector<8x32xf32>
    %28 = tpu.matmul %26, %27, %cst_18 {dimension_numbers = #tpu.dot_dimension_numbers<[1], [0], [0], [1], [0, 0, 1, 1], [], []>} : vector<8x36xf32>, vector<36x32xf32>, vector<8x32xf32> -> vector<8x32xf32>
    %c2 = arith.constant 2 : index
    %c0_19 = arith.constant 0 : index
    %29 = vector.load %arg7[%c2, %c0_19] : memref<8x128xf32, #tpu.memory_space<vmem>>, vector<1x32xf32>
    %30 = vector.broadcast %29 : vector<1x32xf32> to vector<8x32xf32>
    %31 = arith.addf %28, %30 : vector<8x32xf32>
    %32 = vector.extract_strided_slice %31 {offsets = [0, 0], sizes = [8, 16], strides = [1, 1]} : vector<8x32xf32> to vector<8x16xf32>
    %33 = vector.extract_strided_slice %31 {offsets = [0, 16], sizes = [8, 16], strides = [1, 1]} : vector<8x32xf32> to vector<8x16xf32>
    %cst_20 = arith.constant dense<0.000000e+00> : vector<16xf32>
    %34 = vector.multi_reduction <add>, %32, %cst_20 [0] : vector<8x16xf32> to vector<16xf32>
    %35 = vector.shape_cast %34 : vector<16xf32> to vector<1x16xf32>
    %cst_21 = arith.constant 8.000000e+00 : f32
    %36 = vector.broadcast %cst_21 : f32 to vector<1x16xf32>
    %37 = arith.divf %35, %36 : vector<1x16xf32>
    %38 = vector.broadcast %37 : vector<1x16xf32> to vector<8x16xf32>
    %39 = arith.subf %32, %38 : vector<8x16xf32>
    %40 = vector.broadcast %37 : vector<1x16xf32> to vector<8x16xf32>
    %41 = arith.subf %32, %40 : vector<8x16xf32>
    %42 = arith.mulf %39, %41 : vector<8x16xf32>
    %cst_22 = arith.constant dense<0.000000e+00> : vector<16xf32>
    %43 = vector.multi_reduction <add>, %42, %cst_22 [0] : vector<8x16xf32> to vector<16xf32>
    %44 = vector.shape_cast %43 : vector<16xf32> to vector<1x16xf32>
    %cst_23 = arith.constant 8.000000e+00 : f32
    %45 = vector.broadcast %cst_23 : f32 to vector<1x16xf32>
    %46 = arith.divf %44, %45 : vector<1x16xf32>
    %47 = vector.broadcast %37 : vector<1x16xf32> to vector<8x16xf32>
    %48 = arith.subf %32, %47 : vector<8x16xf32>
    %cst_24 = arith.constant 1.000000e-03 : f32
    %49 = vector.broadcast %cst_24 : f32 to vector<1x16xf32>
    %50 = arith.addf %46, %49 : vector<1x16xf32>
    %51 = math.rsqrt %50 : vector<1x16xf32>
    %52 = vector.broadcast %51 : vector<1x16xf32> to vector<8x16xf32>
    %53 = arith.mulf %48, %52 : vector<8x16xf32>
    %cst_25 = arith.constant dense<0.000000e+00> : vector<16xf32>
    %54 = vector.multi_reduction <add>, %33, %cst_25 [0] : vector<8x16xf32> to vector<16xf32>
    %55 = vector.shape_cast %54 : vector<16xf32> to vector<1x16xf32>
    %cst_26 = arith.constant 8.000000e+00 : f32
    %56 = vector.broadcast %cst_26 : f32 to vector<1x16xf32>
    %57 = arith.divf %55, %56 : vector<1x16xf32>
    %58 = vector.broadcast %57 : vector<1x16xf32> to vector<8x16xf32>
    %59 = arith.subf %33, %58 : vector<8x16xf32>
    %60 = vector.broadcast %57 : vector<1x16xf32> to vector<8x16xf32>
    %61 = arith.subf %33, %60 : vector<8x16xf32>
    %62 = arith.mulf %59, %61 : vector<8x16xf32>
    %cst_27 = arith.constant dense<0.000000e+00> : vector<16xf32>
    %63 = vector.multi_reduction <add>, %62, %cst_27 [0] : vector<8x16xf32> to vector<16xf32>
    %64 = vector.shape_cast %63 : vector<16xf32> to vector<1x16xf32>
    %cst_28 = arith.constant 8.000000e+00 : f32
    %65 = vector.broadcast %cst_28 : f32 to vector<1x16xf32>
    %66 = arith.divf %64, %65 : vector<1x16xf32>
    %67 = vector.broadcast %57 : vector<1x16xf32> to vector<8x16xf32>
    %68 = arith.subf %33, %67 : vector<8x16xf32>
    %cst_29 = arith.constant 1.000000e-03 : f32
    %69 = vector.broadcast %cst_29 : f32 to vector<1x16xf32>
    %70 = arith.addf %66, %69 : vector<1x16xf32>
    %71 = math.rsqrt %70 : vector<1x16xf32>
    %72 = vector.broadcast %71 : vector<1x16xf32> to vector<8x16xf32>
    %73 = arith.mulf %68, %72 : vector<8x16xf32>
    %cst_30 = arith.constant 5.000000e-01 : f32
    %74 = vector.broadcast %cst_30 : f32 to vector<8x16xf32>
    %75 = arith.mulf %74, %73 : vector<8x16xf32>
    %76 = math.exp %75 : vector<8x16xf32>
    %77 = arith.mulf %76, %76 : vector<8x16xf32>
    %78 = arith.mulf %76, %2 : vector<8x16xf32>
    %cst_31 = arith.constant 1.000000e+00 : f32
    %79 = vector.broadcast %cst_31 : f32 to vector<8x16xf32>
    %80 = arith.mulf %78, %79 : vector<8x16xf32>
    %81 = arith.addf %53, %80 : vector<8x16xf32>
    %cst_32 = arith.constant dense<0xFF800000> : vector<8xf32>
    %82 = vector.multi_reduction <maximumf>, %81, %cst_32 [1] : vector<8x16xf32> to vector<8xf32>
    %83 = vector.shape_cast %82 : vector<8xf32> to vector<8x1xf32>
    %84 = vector.broadcast %83 : vector<8x1xf32> to vector<8x16xf32>
    %85 = arith.subf %81, %84 : vector<8x16xf32>
    %86 = math.exp %85 : vector<8x16xf32>
    %cst_33 = arith.constant dense<0.000000e+00> : vector<8xf32>
    %87 = vector.multi_reduction <add>, %86, %cst_33 [1] : vector<8x16xf32> to vector<8xf32>
    %88 = vector.shape_cast %87 : vector<8xf32> to vector<8x1xf32>
    %89 = tpu.reciprocal %88 {approx = true} : vector<8x1xf32> -> vector<8x1xf32>
    %90 = vector.broadcast %89 : vector<8x1xf32> to vector<8x16xf32>
    %91 = arith.mulf %86, %90 : vector<8x16xf32>
    %c0_34 = arith.constant 0 : index
    %c0_35 = arith.constant 0 : index
    %92 = vector.load %arg6[%c0_34, %c0_35] : memref<16x128xf32, #tpu.memory_space<vmem>>, vector<16x128xf32>
    %cst_36 = arith.constant dense<0.000000e+00> : vector<8x128xf32>
    %93 = tpu.matmul %91, %92, %cst_36 {dimension_numbers = #tpu.dot_dimension_numbers<[1], [0], [0], [1], [0, 0, 1, 1], [], []>} : vector<8x16xf32>, vector<16x128xf32>, vector<8x128xf32> -> vector<8x128xf32>
    %c1 = arith.constant 1 : index
    %c0_37 = arith.constant 0 : index
    %94 = vector.load %arg7[%c1, %c0_37] : memref<8x128xf32, #tpu.memory_space<vmem>>, vector<1x128xf32>
    %95 = vector.broadcast %94 : vector<1x128xf32> to vector<8x128xf32>
    %96 = arith.addf %93, %95 : vector<8x128xf32>
    %cst_38 = arith.constant dense<0.000000e+00> : vector<128xf32>
    %97 = vector.multi_reduction <add>, %96, %cst_38 [0] : vector<8x128xf32> to vector<128xf32>
    %98 = vector.shape_cast %97 : vector<128xf32> to vector<1x128xf32>
    %cst_39 = arith.constant 8.000000e+00 : f32
    %99 = vector.broadcast %cst_39 : f32 to vector<1x128xf32>
    %100 = arith.divf %98, %99 : vector<1x128xf32>
    %101 = vector.broadcast %100 : vector<1x128xf32> to vector<8x128xf32>
    %102 = arith.subf %96, %101 : vector<8x128xf32>
    %103 = vector.broadcast %100 : vector<1x128xf32> to vector<8x128xf32>
    %104 = arith.subf %96, %103 : vector<8x128xf32>
    %105 = arith.mulf %102, %104 : vector<8x128xf32>
    %cst_40 = arith.constant dense<0.000000e+00> : vector<128xf32>
    %106 = vector.multi_reduction <add>, %105, %cst_40 [0] : vector<8x128xf32> to vector<128xf32>
    %107 = vector.shape_cast %106 : vector<128xf32> to vector<1x128xf32>
    %cst_41 = arith.constant 8.000000e+00 : f32
    %108 = vector.broadcast %cst_41 : f32 to vector<1x128xf32>
    %109 = arith.divf %107, %108 : vector<1x128xf32>
    %110 = vector.broadcast %100 : vector<1x128xf32> to vector<8x128xf32>
    %111 = arith.subf %96, %110 : vector<8x128xf32>
    %cst_42 = arith.constant 1.000000e-03 : f32
    %112 = vector.broadcast %cst_42 : f32 to vector<1x128xf32>
    %113 = arith.addf %109, %112 : vector<1x128xf32>
    %114 = math.rsqrt %113 : vector<1x128xf32>
    %115 = vector.broadcast %114 : vector<1x128xf32> to vector<8x128xf32>
    %116 = arith.mulf %111, %115 : vector<8x128xf32>
    %cst_43 = arith.constant dense<0xFF800000> : vector<8xf32>
    %117 = vector.multi_reduction <maximumf>, %116, %cst_43 [1] : vector<8x128xf32> to vector<8xf32>
    %118 = vector.shape_cast %117 : vector<8xf32> to vector<8x1xf32>
    %119 = vector.broadcast %118 : vector<8x1xf32> to vector<8x128xf32>
    %120 = arith.subf %116, %119 : vector<8x128xf32>
    %121 = math.exp %120 : vector<8x128xf32>
    %cst_44 = arith.constant dense<0.000000e+00> : vector<8xf32>
    %122 = vector.multi_reduction <add>, %121, %cst_44 [1] : vector<8x128xf32> to vector<8xf32>
    %123 = vector.shape_cast %122 : vector<8xf32> to vector<8x1xf32>
    %124 = tpu.reciprocal %123 {approx = true} : vector<8x1xf32> -> vector<8x1xf32>
    %125 = vector.broadcast %124 : vector<8x1xf32> to vector<8x128xf32>
    %126 = arith.mulf %121, %125 : vector<8x128xf32>
    %127 = vector.broadcast %118 : vector<8x1xf32> to vector<8x128xf32>
    %128 = arith.subf %116, %127 : vector<8x128xf32>
    %129 = math.log %123 : vector<8x1xf32>
    %130 = vector.broadcast %129 : vector<8x1xf32> to vector<8x128xf32>
    %131 = arith.subf %128, %130 : vector<8x128xf32>
    %c40 = arith.constant 40 : index
    %c0_45 = arith.constant 0 : index
    %132 = vector.load %arg8[%c40, %c0_45] : memref<72x128xf32, #tpu.memory_space<vmem>>, vector<16x16xf32>
    %c56 = arith.constant 56 : index
    %c0_46 = arith.constant 0 : index
    %133 = vector.load %arg8[%c56, %c0_46] : memref<72x128xf32, #tpu.memory_space<vmem>>, vector<16x4xf32>
    %cst_47 = arith.constant dense<0.000000e+00> : vector<8x16xf32>
    %134 = tpu.matmul %91, %132, %cst_47 {dimension_numbers = #tpu.dot_dimension_numbers<[1], [0], [0], [1], [0, 0, 1, 1], [], []>} : vector<8x16xf32>, vector<16x16xf32>, vector<8x16xf32> -> vector<8x16xf32>
    %c3 = arith.constant 3 : index
    %c0_48 = arith.constant 0 : index
    %135 = vector.load %arg7[%c3, %c0_48] : memref<8x128xf32, #tpu.memory_space<vmem>>, vector<1x16xf32>
    %136 = vector.broadcast %135 : vector<1x16xf32> to vector<8x16xf32>
    %137 = arith.addf %134, %136 : vector<8x16xf32>
    %cst_49 = arith.constant 0.000000e+00 : f32
    %138 = vector.broadcast %cst_49 : f32 to vector<8x16xf32>
    %139 = arith.maximumf %137, %138 : vector<8x16xf32>
    %140 = vector.broadcast %cst_49 : f32 to vector<8x16xf32>
    %141 = arith.subf %137, %140 : vector<8x16xf32>
    %142 = arith.cmpf one, %141, %141 : vector<8x16xf32>
    %143 = vector.broadcast %cst_49 : f32 to vector<8x16xf32>
    %144 = arith.addf %137, %143 : vector<8x16xf32>
    %145 = math.absf %141 : vector<8x16xf32>
    %cst_50 = arith.constant 0.000000e+00 : f32
    %146 = vector.broadcast %cst_50 : f32 to vector<8x16xf32>
    %147 = arith.subf %146, %145 : vector<8x16xf32>
    %148 = math.exp %147 : vector<8x16xf32>
    %149 = math.log1p %148 : vector<8x16xf32>
    %150 = arith.addf %139, %149 : vector<8x16xf32>
    %151 = arith.select %142, %144, %150 : vector<8x16xi1>, vector<8x16xf32>
    %cst_51 = arith.constant dense<0.000000e+00> : vector<8x4xf32>
    %152 = tpu.matmul %151, %133, %cst_51 {dimension_numbers = #tpu.dot_dimension_numbers<[1], [0], [0], [1], [0, 0, 1, 1], [], []>} : vector<8x16xf32>, vector<16x4xf32>, vector<8x4xf32> -> vector<8x4xf32>
    %c4 = arith.constant 4 : index
    %c0_52 = arith.constant 0 : index
    %153 = vector.load %arg7[%c4, %c0_52] : memref<8x128xf32, #tpu.memory_space<vmem>>, vector<1x4xf32>
    %154 = vector.broadcast %153 : vector<1x4xf32> to vector<8x4xf32>
    %155 = arith.addf %152, %154 : vector<8x4xf32>
    %cst_53 = arith.constant dense<0xFF800000> : vector<8xf32>
    %156 = vector.multi_reduction <maximumf>, %155, %cst_53 [1] : vector<8x4xf32> to vector<8xf32>
    %157 = vector.shape_cast %156 : vector<8xf32> to vector<8x1xf32>
    %158 = vector.broadcast %157 : vector<8x1xf32> to vector<8x4xf32>
    %159 = arith.subf %155, %158 : vector<8x4xf32>
    %160 = math.exp %159 : vector<8x4xf32>
    %cst_54 = arith.constant dense<0.000000e+00> : vector<8xf32>
    %161 = vector.multi_reduction <add>, %160, %cst_54 [1] : vector<8x4xf32> to vector<8xf32>
    %162 = vector.shape_cast %161 : vector<8xf32> to vector<8x1xf32>
    %163 = tpu.reciprocal %162 {approx = true} : vector<8x1xf32> -> vector<8x1xf32>
    %164 = vector.broadcast %163 : vector<8x1xf32> to vector<8x4xf32>
    %165 = arith.mulf %160, %164 : vector<8x4xf32>
    %166 = vector.broadcast %157 : vector<8x1xf32> to vector<8x4xf32>
    %167 = arith.subf %155, %166 : vector<8x4xf32>
    %168 = math.log %162 : vector<8x1xf32>
    %169 = vector.broadcast %168 : vector<8x1xf32> to vector<8x4xf32>
    %170 = arith.subf %167, %169 : vector<8x4xf32>
    %171 = arith.mulf %0, %131 : vector<8x128xf32>
    %cst_55 = arith.constant dense<0.000000e+00> : vector<8xf32>
    %172 = vector.multi_reduction <add>, %171, %cst_55 [1] : vector<8x128xf32> to vector<8xf32>
    %173 = vector.shape_cast %172 : vector<8xf32> to vector<8x1xf32>
    %cst_56 = arith.constant 0.000000e+00 : f32
    %174 = vector.broadcast %cst_56 : f32 to vector<8x1xf32>
    %175 = arith.subf %174, %173 : vector<8x1xf32>
    %176 = arith.mulf %1, %170 : vector<8x4xf32>
    %cst_57 = arith.constant dense<0.000000e+00> : vector<8xf32>
    %177 = vector.multi_reduction <add>, %176, %cst_57 [1] : vector<8x4xf32> to vector<8xf32>
    %178 = vector.shape_cast %177 : vector<8xf32> to vector<8x1xf32>
    %179 = arith.subf %175, %178 : vector<8x1xf32>
    %c5 = arith.constant 5 : index
    %c0_58 = arith.constant 0 : index
    %180 = vector.load %arg7[%c5, %c0_58] : memref<8x128xf32, #tpu.memory_space<vmem>>, vector<1x16xf32>
    %c6 = arith.constant 6 : index
    %c0_59 = arith.constant 0 : index
    %181 = vector.load %arg7[%c6, %c0_59] : memref<8x128xf32, #tpu.memory_space<vmem>>, vector<1x16xf32>
    %c7 = arith.constant 7 : index
    %c0_60 = arith.constant 0 : index
    %182 = vector.load %arg7[%c7, %c0_60] : memref<8x128xf32, #tpu.memory_space<vmem>>, vector<1x16xf32>
    %183 = vector.broadcast %180 : vector<1x16xf32> to vector<8x16xf32>
    %184 = arith.subf %53, %183 : vector<8x16xf32>
    %185 = vector.broadcast %182 : vector<1x16xf32> to vector<8x16xf32>
    %186 = arith.mulf %77, %185 : vector<8x16xf32>
    %187 = arith.mulf %184, %184 : vector<8x16xf32>
    %188 = vector.broadcast %182 : vector<1x16xf32> to vector<8x16xf32>
    %189 = arith.mulf %187, %188 : vector<8x16xf32>
    %190 = arith.addf %186, %189 : vector<8x16xf32>
    %191 = vector.broadcast %181 : vector<1x16xf32> to vector<8x16xf32>
    %192 = arith.subf %191, %73 : vector<8x16xf32>
    %193 = arith.addf %190, %192 : vector<8x16xf32>
    %cst_61 = arith.constant dense<0.000000e+00> : vector<8xf32>
    %194 = vector.multi_reduction <add>, %193, %cst_61 [1] : vector<8x16xf32> to vector<8xf32>
    %195 = vector.shape_cast %194 : vector<8xf32> to vector<8x1xf32>
    %cst_62 = arith.constant 1.600000e+01 : f32
    %196 = vector.broadcast %cst_62 : f32 to vector<8x1xf32>
    %197 = arith.subf %195, %196 : vector<8x1xf32>
    %cst_63 = arith.constant 5.000000e-01 : f32
    %198 = vector.broadcast %cst_63 : f32 to vector<8x1xf32>
    %199 = arith.mulf %198, %197 : vector<8x1xf32>
    %200 = arith.addf %179, %199 : vector<8x1xf32>
    %c0_64 = arith.constant 0 : index
    %c0_65 = arith.constant 0 : index
    %201 = vector.load %arg9[%c0_64, %c0_65] : memref<8x128xf32, #tpu.memory_space<vmem>>, vector<8x128xf32>
    tpu.vector_store %arg9[%c0_64, %c0_65], %126 {strides = array<i32>} : memref<8x128xf32, #tpu.memory_space<vmem>>, vector<8x128xf32>,
    %cst_66 = arith.constant 0.000000e+00 : f32
    %202 = vector.broadcast %cst_66 : f32 to vector<8x105xf32>
    %203 = tpu.concatenate %91, %165, %200, %179, %199, %202 in 1 : vector<8x16xf32>, vector<8x4xf32>, vector<8x1xf32>, vector<8x1xf32>, vector<8x1xf32>, vector<8x105xf32> -> vector<8x128xf32>
    %c0_67 = arith.constant 0 : index
    %c0_68 = arith.constant 0 : index
    %204 = vector.load %arg10[%c0_67, %c0_68] : memref<8x128xf32, #tpu.memory_space<vmem>>, vector<8x128xf32>
    tpu.vector_store %arg10[%c0_67, %c0_68], %203 {strides = array<i32>} : memref<8x128xf32, #tpu.memory_space<vmem>>, vector<8x128xf32>,
    return
  }
}

</mosaic_0001>

<llo_original>
// kernel: tpu_custom_call.1
$region0: #{tpu_custom_call.1}
  #allocation0 [shape = 'u32[]', space=smem, size = 0x4, offset = 0x4, fixed_abs, tag = 'smem constant byte address 0x4 - core index']
  #allocation1 [shape = 'u32[144,128]{1,0:T(1,128)}', space=vmem, size = 0x12000, scoped, tag = 'internal scratch']
  %s0 = inlined_call_operand.vmem [shape: f32[8,128], index: 0, kind: input, shape index: {}]
  %s1 = inlined_call_operand.vmem [shape: bf16[8,1024], index: 1, kind: input, shape index: {}]
  %s2 = inlined_call_operand.vmem [shape: f32[8,4], index: 2, kind: input, shape index: {}]
  %s3 = inlined_call_operand.vmem [shape: f32[8,16], index: 3, kind: input, shape index: {}]
  %s4 = inlined_call_operand.hbm [shape: bf16[1024,128], index: 4, kind: input, shape index: {}]
  %s5 = inlined_call_operand.vmem [shape: f32[256,32], index: 5, kind: input, shape index: {}]
  %s6 = inlined_call_operand.vmem [shape: f32[16,128], index: 6, kind: input, shape index: {}]
  %s7 = inlined_call_operand.vmem [shape: f32[8,128], index: 7, kind: input, shape index: {}]
  %s8 = inlined_call_operand.vmem [shape: f32[72,128], index: 8, kind: input, shape index: {}]
  %s9 = inlined_call_operand.hbm [shape: f32[8,128], index: 9, kind: output, shape index: {0}]
  %s10 = inlined_call_operand.hbm [shape: f32[8,128], index: 10, kind: output, shape index: {1}]
  %11 = xla_tuple %s9, %s10
  %s12 = sld [smem:[#allocation0]]
  $region58: #{tpu_custom_call.1} parent=0
    _
  %s14 = ssub.s32 1, %s12
  %s15 = scalar_select 0, %s14, %s12
  $region1: #{tpu_custom_call.1} parent=0
    #allocation2 [shape = 'u8[262144]{0}', space=vmem, size = 0x40000, scoped, tag = 'input window, operand 4, single buffered']
    #allocation3 [shape = 's32[1]{0}', space=sflag, size = 0x4, scoped, tag = 'scoped memory for tpu_custom_call.1']
    #allocation4 [shape = 's32[1]{0}', space=sflag, size = 0x4, scoped, tag = 'scoped memory for tpu_custom_call.1']
    #allocation5 [shape = 'u8[4096]{0}', space=vmem, size = 0x1000, scoped, tag = 'output window, operand 0, single buffered']
    #allocation6 [shape = 'u8[4096]{0}', space=vmem, size = 0x1000, scoped, tag = 'output window, operand 1, single buffered']
    #allocation7 [shape = 's32[1]{0}', space=sflag, size = 0x4, scoped, tag = 'scoped memory for tpu_custom_call.1']
    %16 = vsyncpa [#allocation3], 0
    %17 = vsyncpa [#allocation4], 0
    %18 = vsyncpa [#allocation7], 0
    // Predicated region
    $region2: #{tpu_custom_call.1} parent=1 // pred_check
      _
    $region3: #{tpu_custom_call.1} parent=1 // pred_check_branch
      %20 = sbr.rel (0) target = $region5
    $region4: #{tpu_custom_call.1} parent=1 // pred_region
      _
    $region5: #{tpu_custom_call.1} parent=1 // pred_fallthru
      _
    // Predicated region
    $region6: #{tpu_custom_call.1} parent=1 // pred_check
      _
    $region7: #{tpu_custom_call.1} parent=1 // pred_check_branch
      %22 = sbr.rel (0) target = $region9
    $region8: #{tpu_custom_call.1} parent=1 // pred_region
      _
    $region9: #{tpu_custom_call.1} parent=1 // pred_fallthru
      _
    // Predicated region
    $region10: #{tpu_custom_call.1} parent=1 // pred_check
      _
    $region11: #{tpu_custom_call.1} parent=1 // pred_check_branch
      %24 = sbr.rel (0) target = $region13
    $region12: #{tpu_custom_call.1} parent=1 // pred_region
      _
    $region13: #{tpu_custom_call.1} parent=1 // pred_fallthru
      _
    // Predicated region
    $region14: #{tpu_custom_call.1} parent=1 // pred_check
      _
    $region15: #{tpu_custom_call.1} parent=1 // pred_check_branch
      %26 = sbr.rel (0) target = $region17
    $region16: #{tpu_custom_call.1} parent=1 // pred_region
      _
    $region17: #{tpu_custom_call.1} parent=1 // pred_fallthru
      _
    // Predicated region
    $region18: #{tpu_custom_call.1} parent=1 // pred_check
      _
    $region19: #{tpu_custom_call.1} parent=1 // pred_check_branch
      %28 = sbr.rel (0) target = $region21
    $region20: #{tpu_custom_call.1} parent=1 // pred_region
      %s30 = ssub.s32 8192, 8192
      %31 = vsyncadd [#allocation3], %s30
      %s32 = sshll.u32 [#allocation2], 4
      %s33 = int_to_ptr.vmem [resolvable:$true] %s32
      %38 = dma.hbm_to_vmem [thread:$0]  %s4, 8192, %s33, [#allocation3], 64, 64, 4
    $region21: #{tpu_custom_call.1} parent=1 // pred_fallthru
      _
    // Predicated region
    $region22: #{tpu_custom_call.1} parent=1 // pred_check
      _
    $region23: #{tpu_custom_call.1} parent=1 // pred_check_branch
      %40 = sbr.rel (0) target = $region25
    $region24: #{tpu_custom_call.1} parent=1 // pred_region
      _
    $region25: #{tpu_custom_call.1} parent=1 // pred_fallthru
      _
    // Predicated region
    $region26: #{tpu_custom_call.1} parent=1 // pred_check
      _
    $region27: #{tpu_custom_call.1} parent=1 // pred_check_branch
      %42 = sbr.rel (0) target = $region29
    $region28: #{tpu_custom_call.1} parent=1 // pred_region
      _
    $region29: #{tpu_custom_call.1} parent=1 // pred_fallthru
      _
    // Predicated region
    $region30: #{tpu_custom_call.1} parent=1 // pred_check
      _
    $region31: #{tpu_custom_call.1} parent=1 // pred_check_branch
      %44 = sbr.rel (0) target = $region33
    $region32: #{tpu_custom_call.1} parent=1 // pred_region
      _
    $region33: #{tpu_custom_call.1} parent=1 // pred_fallthru
      _
    // Predicated region
    $region34: #{tpu_custom_call.1} parent=1 // pred_check
      _
    $region35: #{tpu_custom_call.1} parent=1 // pred_check_branch
      %46 = sbr.rel (0) target = $region37
    $region36: #{tpu_custom_call.1} parent=1 // pred_region
      _
    $region37: #{tpu_custom_call.1} parent=1 // pred_fallthru
      _
    // Predicated region
    $region38: #{tpu_custom_call.1} parent=1 // pred_check
      _
    $region39: #{tpu_custom_call.1} parent=1 // pred_check_branch
      %48 = sbr.rel (0) target = $region41
    $region40: #{tpu_custom_call.1} parent=1 // pred_region
      %49 = dma.done [#allocation3], 8192
    $region41: #{tpu_custom_call.1} parent=1 // pred_fallthru
      _
    %v51 = vld [vmem:[%s0] sm:$0xff]
    %v52 = vld [vmem:[%s2] sm:$0xff]
    %v53 = vld [vmem:[%s3] sm:$0xff]
    %v54 = vld [vmem:[%s1] sm:$0xff]
    %v55 = vld [vmem:[%s1 + $0x8] sm:$0xff]
    %v56 = vld [vmem:[%s1 + $0x10] sm:$0xff]
    %v57 = vld [vmem:[%s1 + $0x18] sm:$0xff]
    %v58 = vld [vmem:[#allocation2] sm:$0xf]
    %v59 = vld [vmem:[#allocation2 + $0x4] sm:$0xf]
    %v60 = vld [vmem:[#allocation2 + $0x8] sm:$0xf]
    %v61 = vld [vmem:[#allocation2 + $0xc] sm:$0xf]
    %v62 = vld [vmem:[#allocation2 + $0x10] sm:$0xf]
    %v63 = vld [vmem:[#allocation2 + $0x14] sm:$0xf]
    %v64 = vld [vmem:[#allocation2 + $0x18] sm:$0xf]
    %v65 = vld [vmem:[#allocation2 + $0x1c] sm:$0xf]
    %v66 = vld [vmem:[#allocation2 + $0x20] sm:$0xf]
    %v67 = vld [vmem:[#allocation2 + $0x24] sm:$0xf]
    %v68 = vld [vmem:[#allocation2 + $0x28] sm:$0xf]
    %v69 = vld [vmem:[#allocation2 + $0x2c] sm:$0xf]
    %v70 = vld [vmem:[#allocation2 + $0x30] sm:$0xf]
    %v71 = vld [vmem:[#allocation2 + $0x34] sm:$0xf]
    %v72 = vld [vmem:[#allocation2 + $0x38] sm:$0xf]
    %v73 = vld [vmem:[#allocation2 + $0x3c] sm:$0xf]
    %v74 = vld [vmem:[#allocation2 + $0x40] sm:$0xf]
    %v75 = vld [vmem:[#allocation2 + $0x44] sm:$0xf]
    %v76 = vld [vmem:[#allocation2 + $0x48] sm:$0xf]
    %v77 = vld [vmem:[#allocation2 + $0x4c] sm:$0xf]
    %v78 = vld [vmem:[#allocation2 + $0x50] sm:$0xf]
    %v79 = vld [vmem:[#allocation2 + $0x54] sm:$0xf]
    %v80 = vld [vmem:[#allocation2 + $0x58] sm:$0xf]
    %v81 = vld [vmem:[#allocation2 + $0x5c] sm:$0xf]
    %v82 = vld [vmem:[#allocation2 + $0x60] sm:$0xf]
    %v83 = vld [vmem:[#allocation2 + $0x64] sm:$0xf]
    %v84 = vld [vmem:[#allocation2 + $0x68] sm:$0xf]
    %v85 = vld [vmem:[#allocation2 + $0x6c] sm:$0xf]
    %v86 = vld [vmem:[#allocation2 + $0x70] sm:$0xf]
    %v87 = vld [vmem:[#allocation2 + $0x74] sm:$0xf]
    %v88 = vld [vmem:[#allocation2 + $0x78] sm:$0xf]
    %v89 = vld [vmem:[#allocation2 + $0x7c] sm:$0xf]
    %v90 = vld [vmem:[#allocation2 + $0x80] sm:$0xf]
    %v91 = vld [vmem:[#allocation2 + $0x84] sm:$0xf]
    %v92 = vld [vmem:[#allocation2 + $0x88] sm:$0xf]
    %v93 = vld [vmem:[#allocation2 + $0x8c] sm:$0xf]
    %v94 = vld [vmem:[#allocation2 + $0x90] sm:$0xf]
    %v95 = vld [vmem:[#allocation2 + $0x94] sm:$0xf]
    %v96 = vld [vmem:[#allocation2 + $0x98] sm:$0xf]
    %v97 = vld [vmem:[#allocation2 + $0x9c] sm:$0xf]
    %v98 = vld [vmem:[#allocation2 + $0xa0] sm:$0xf]
    %v99 = vld [vmem:[#allocation2 + $0xa4] sm:$0xf]
    %v100 = vld [vmem:[#allocation2 + $0xa8] sm:$0xf]
    %v101 = vld [vmem:[#allocation2 + $0xac] sm:$0xf]
    %v102 = vld [vmem:[#allocation2 + $0xb0] sm:$0xf]
    %v103 = vld [vmem:[#allocation2 + $0xb4] sm:$0xf]
    %v104 = vld [vmem:[#allocation2 + $0xb8] sm:$0xf]
    %v105 = vld [vmem:[#allocation2 + $0xbc] sm:$0xf]
    %v106 = vld [vmem:[#allocation2 + $0xc0] sm:$0xf]
    %v107 = vld [vmem:[#allocation2 + $0xc4] sm:$0xf]
    %v108 = vld [vmem:[#allocation2 + $0xc8] sm:$0xf]
    %v109 = vld [vmem:[#allocation2 + $0xcc] sm:$0xf]
    %v110 = vld [vmem:[#allocation2 + $0xd0] sm:$0xf]
    %v111 = vld [vmem:[#allocation2 + $0xd4] sm:$0xf]
    %v112 = vld [vmem:[#allocation2 + $0xd8] sm:$0xf]
    %v113 = vld [vmem:[#allocation2 + $0xdc] sm:$0xf]
    %v114 = vld [vmem:[#allocation2 + $0xe0] sm:$0xf]
    %v115 = vld [vmem:[#allocation2 + $0xe4] sm:$0xf]
    %v116 = vld [vmem:[#allocation2 + $0xe8] sm:$0xf]
    %v117 = vld [vmem:[#allocation2 + $0xec] sm:$0xf]
    %v118 = vld [vmem:[#allocation2 + $0xf0] sm:$0xf]
    %v119 = vld [vmem:[#allocation2 + $0xf4] sm:$0xf]
    %v120 = vld [vmem:[#allocation2 + $0xf8] sm:$0xf]
    %v121 = vld [vmem:[#allocation2 + $0xfc] sm:$0xf]
    %v122 = vld [vmem:[#allocation2 + $0x100] sm:$0xf]
    %v123 = vld [vmem:[#allocation2 + $0x104] sm:$0xf]
    %v124 = vld [vmem:[#allocation2 + $0x108] sm:$0xf]
    %v125 = vld [vmem:[#allocation2 + $0x10c] sm:$0xf]
    %v126 = vld [vmem:[#allocation2 + $0x110] sm:$0xf]
    %v127 = vld [vmem:[#allocation2 + $0x114] sm:$0xf]
    %v128 = vld [vmem:[#allocation2 + $0x118] sm:$0xf]
    %v129 = vld [vmem:[#allocation2 + $0x11c] sm:$0xf]
    %v130 = vld [vmem:[#allocation2 + $0x120] sm:$0xf]
    %v131 = vld [vmem:[#allocation2 + $0x124] sm:$0xf]
    %v132 = vld [vmem:[#allocation2 + $0x128] sm:$0xf]
    %v133 = vld [vmem:[#allocation2 + $0x12c] sm:$0xf]
    %v134 = vld [vmem:[#allocation2 + $0x130] sm:$0xf]
    %v135 = vld [vmem:[#allocation2 + $0x134] sm:$0xf]
    %v136 = vld [vmem:[#allocation2 + $0x138] sm:$0xf]
    %v137 = vld [vmem:[#allocation2 + $0x13c] sm:$0xf]
    %v138 = vld [vmem:[#allocation2 + $0x140] sm:$0xf]
    %v139 = vld [vmem:[#allocation2 + $0x144] sm:$0xf]
    %v140 = vld [vmem:[#allocation2 + $0x148] sm:$0xf]
    %v141 = vld [vmem:[#allocation2 + $0x14c] sm:$0xf]
    %v142 = vld [vmem:[#allocation2 + $0x150] sm:$0xf]
    %v143 = vld [vmem:[#allocation2 + $0x154] sm:$0xf]
    %v144 = vld [vmem:[#allocation2 + $0x158] sm:$0xf]
    %v145 = vld [vmem:[#allocation2 + $0x15c] sm:$0xf]
    %v146 = vld [vmem:[#allocation2 + $0x160] sm:$0xf]
    %v147 = vld [vmem:[#allocation2 + $0x164] sm:$0xf]
    %v148 = vld [vmem:[#allocation2 + $0x168] sm:$0xf]
    %v149 = vld [vmem:[#allocation2 + $0x16c] sm:$0xf]
    %v150 = vld [vmem:[#allocation2 + $0x170] sm:$0xf]
    %v151 = vld [vmem:[#allocation2 + $0x174] sm:$0xf]
    %v152 = vld [vmem:[#allocation2 + $0x178] sm:$0xf]
    %v153 = vld [vmem:[#allocation2 + $0x17c] sm:$0xf]
    %v154 = vld [vmem:[#allocation2 + $0x180] sm:$0xf]
    %v155 = vld [vmem:[#allocation2 + $0x184] sm:$0xf]
    %v156 = vld [vmem:[#allocation2 + $0x188] sm:$0xf]
    %v157 = vld [vmem:[#allocation2 + $0x18c] sm:$0xf]
    %v158 = vld [vmem:[#allocation2 + $0x190] sm:$0xf]
    %v159 = vld [vmem:[#allocation2 + $0x194] sm:$0xf]
    %v160 = vld [vmem:[#allocation2 + $0x198] sm:$0xf]
    %v161 = vld [vmem:[#allocation2 + $0x19c] sm:$0xf]
    %v162 = vld [vmem:[#allocation2 + $0x1a0] sm:$0xf]
    %v163 = vld [vmem:[#allocation2 + $0x1a4] sm:$0xf]
    %v164 = vld [vmem:[#allocation2 + $0x1a8] sm:$0xf]
    %v165 = vld [vmem:[#allocation2 + $0x1ac] sm:$0xf]
    %v166 = vld [vmem:[#allocation2 + $0x1b0] sm:$0xf]
    %v167 = vld [vmem:[#allocation2 + $0x1b4] sm:$0xf]
    %v168 = vld [vmem:[#allocation2 + $0x1b8] sm:$0xf]
    %v169 = vld [vmem:[#allocation2 + $0x1bc] sm:$0xf]
    %v170 = vld [vmem:[#allocation2 + $0x1c0] sm:$0xf]
    %v171 = vld [vmem:[#allocation2 + $0x1c4] sm:$0xf]
    %v172 = vld [vmem:[#allocation2 + $0x1c8] sm:$0xf]
    %v173 = vld [vmem:[#allocation2 + $0x1cc] sm:$0xf]
    %v174 = vld [vmem:[#allocation2 + $0x1d0] sm:$0xf]
    %v175 = vld [vmem:[#allocation2 + $0x1d4] sm:$0xf]
    %v176 = vld [vmem:[#allocation2 + $0x1d8] sm:$0xf]
    %v177 = vld [vmem:[#allocation2 + $0x1dc] sm:$0xf]
    %v178 = vld [vmem:[#allocation2 + $0x1e0] sm:$0xf]
    %v179 = vld [vmem:[#allocation2 + $0x1e4] sm:$0xf]
    %v180 = vld [vmem:[#allocation2 + $0x1e8] sm:$0xf]
    %v181 = vld [vmem:[#allocation2 + $0x1ec] sm:$0xf]
    %v182 = vld [vmem:[#allocation2 + $0x1f0] sm:$0xf]
    %v183 = vld [vmem:[#allocation2 + $0x1f4] sm:$0xf]
    %v184 = vld [vmem:[#allocation2 + $0x1f8] sm:$0xf]
    %v185 = vld [vmem:[#allocation2 + $0x1fc] sm:$0xf]
    %v186 = vld [vmem:[%s7] sm:$0x1]
    %v187 = vlaneseq
    %v188 = vshrl.u32 %v187, 7
    %v189 = vsub.s32 0, %v188
    %v190 = vrot.slane %v186, %v189
    %v195 = vunpack.c.l.b16 %v54
    %v196 = vunpack.c.h.b16 %v54
    %v197 = vunpack.c.l.b16 %v55
    %v198 = vunpack.c.h.b16 %v55
    %v199 = vunpack.c.l.b16 %v56
    %v200 = vunpack.c.h.b16 %v56
    %v201 = vunpack.c.l.b16 %v57
    %v202 = vunpack.c.h.b16 %v57
    %v203 = vpack.c.b16 %v195, %v195
    %v204 = vpack.c.b16 %v196, %v196
    %v205 = vpack.c.b16 %v197, %v197
    %v206 = vpack.c.b16 %v198, %v198
    %v207 = vpack.c.b16 %v199, %v199
    %v208 = vpack.c.b16 %v200, %v200
    %v209 = vpack.c.b16 %v201, %v201
    %v210 = vpack.c.b16 %v202, %v202
    %v347 = vunpack.c.l.b16 %v58
    %v348 = vunpack.c.l.b16 %v59
    %v349 = vunpack.c.l.b16 %v60
    %v350 = vunpack.c.l.b16 %v61
    %v351 = vunpack.c.l.b16 %v62
    %v352 = vunpack.c.l.b16 %v63
    %v353 = vunpack.c.l.b16 %v64
    %v354 = vunpack.c.l.b16 %v65
    %v355 = vunpack.c.l.b16 %v66
    %v356 = vunpack.c.l.b16 %v67
    %v357 = vunpack.c.l.b16 %v68
    %v358 = vunpack.c.l.b16 %v69
    %v359 = vunpack.c.l.b16 %v70
    %v360 = vunpack.c.l.b16 %v71
    %v361 = vunpack.c.l.b16 %v72
    %v362 = vunpack.c.l.b16 %v73
    %v363 = vunpack.c.l.b16 %v74
    %v364 = vunpack.c.l.b16 %v75
    %v365 = vunpack.c.l.b16 %v76
    %v366 = vunpack.c.l.b16 %v77
    %v367 = vunpack.c.l.b16 %v78
    %v368 = vunpack.c.l.b16 %v79
    %v369 = vunpack.c.l.b16 %v80
    %v370 = vunpack.c.l.b16 %v81
    %v371 = vunpack.c.l.b16 %v82
    %v372 = vunpack.c.l.b16 %v83
    %v373 = vunpack.c.l.b16 %v84
    %v374 = vunpack.c.l.b16 %v85
    %v375 = vunpack.c.l.b16 %v86
    %v376 = vunpack.c.l.b16 %v87
    %v377 = vunpack.c.l.b16 %v88
    %v378 = vunpack.c.l.b16 %v89
    %v379 = vunpack.c.l.b16 %v90
    %v380 = vunpack.c.l.b16 %v91
    %v381 = vunpack.c.l.b16 %v92
    %v382 = vunpack.c.l.b16 %v93
    %v383 = vunpack.c.l.b16 %v94
    %v384 = vunpack.c.l.b16 %v95
    %v385 = vunpack.c.l.b16 %v96
    %v386 = vunpack.c.l.b16 %v97
    %v387 = vunpack.c.l.b16 %v98
    %v388 = vunpack.c.l.b16 %v99
    %v389 = vunpack.c.l.b16 %v100
    %v390 = vunpack.c.l.b16 %v101
    %v391 = vunpack.c.l.b16 %v102
    %v392 = vunpack.c.l.b16 %v103
    %v393 = vunpack.c.l.b16 %v104
    %v394 = vunpack.c.l.b16 %v105
    %v395 = vunpack.c.l.b16 %v106
    %v396 = vunpack.c.l.b16 %v107
    %v397 = vunpack.c.l.b16 %v108
    %v398 = vunpack.c.l.b16 %v109
    %v399 = vunpack.c.l.b16 %v110
    %v400 = vunpack.c.l.b16 %v111
    %v401 = vunpack.c.l.b16 %v112
    %v402 = vunpack.c.l.b16 %v113
    %v403 = vunpack.c.l.b16 %v114
    %v404 = vunpack.c.l.b16 %v115
    %v405 = vunpack.c.l.b16 %v116
    %v406 = vunpack.c.l.b16 %v117
    %v407 = vunpack.c.l.b16 %v118
    %v408 = vunpack.c.l.b16 %v119
    %v409 = vunpack.c.l.b16 %v120
    %v410 = vunpack.c.l.b16 %v121
    %v411 = vunpack.c.l.b16 %v122
    %v412 = vunpack.c.l.b16 %v123
    %v413 = vunpack.c.l.b16 %v124
    %v414 = vunpack.c.l.b16 %v125
    %v415 = vunpack.c.l.b16 %v126
    %v416 = vunpack.c.l.b16 %v127
    %v417 = vunpack.c.l.b16 %v128
    %v418 = vunpack.c.l.b16 %v129
    %v419 = vunpack.c.l.b16 %v130
    %v420 = vunpack.c.l.b16 %v131
    %v421 = vunpack.c.l.b16 %v132
    %v422 = vunpack.c.l.b16 %v133
    %v423 = vunpack.c.l.b16 %v134
    %v424 = vunpack.c.l.b16 %v135
    %v425 = vunpack.c.l.b16 %v136
    %v426 = vunpack.c.l.b16 %v137
    %v427 = vunpack.c.l.b16 %v138
    %v428 = vunpack.c.l.b16 %v139
    %v429 = vunpack.c.l.b16 %v140
    %v430 = vunpack.c.l.b16 %v141
    %v431 = vunpack.c.l.b16 %v142
    %v432 = vunpack.c.l.b16 %v143
    %v433 = vunpack.c.l.b16 %v144
    %v434 = vunpack.c.l.b16 %v145
    %v435 = vunpack.c.l.b16 %v146
    %v436 = vunpack.c.l.b16 %v147
    %v437 = vunpack.c.l.b16 %v148
    %v438 = vunpack.c.l.b16 %v149
    %v439 = vunpack.c.l.b16 %v150
    %v440 = vunpack.c.l.b16 %v151
    %v441 = vunpack.c.l.b16 %v152
    %v442 = vunpack.c.l.b16 %v153
    %v443 = vunpack.c.l.b16 %v154
    %v444 = vunpack.c.l.b16 %v155
    %v445 = vunpack.c.l.b16 %v156
    %v446 = vunpack.c.l.b16 %v157
    %v447 = vunpack.c.l.b16 %v158
    %v448 = vunpack.c.l.b16 %v159
    %v449 = vunpack.c.l.b16 %v160
    %v450 = vunpack.c.l.b16 %v161
    %v451 = vunpack.c.l.b16 %v162
    %v452 = vunpack.c.l.b16 %v163
    %v453 = vunpack.c.l.b16 %v164
    %v454 = vunpack.c.l.b16 %v165
    %v455 = vunpack.c.l.b16 %v166
    %v456 = vunpack.c.l.b16 %v167
    %v457 = vunpack.c.l.b16 %v168
    %v458 = vunpack.c.l.b16 %v169
    %v459 = vunpack.c.l.b16 %v170
    %v460 = vunpack.c.l.b16 %v171
    %v461 = vunpack.c.l.b16 %v172
    %v462 = vunpack.c.l.b16 %v173
    %v463 = vunpack.c.l.b16 %v174
    %v464 = vunpack.c.l.b16 %v175
    %v465 = vunpack.c.l.b16 %v176
    %v466 = vunpack.c.l.b16 %v177
    %v467 = vunpack.c.l.b16 %v178
    %v468 = vunpack.c.l.b16 %v179
    %v469 = vunpack.c.l.b16 %v180
    %v470 = vunpack.c.l.b16 %v181
    %v471 = vunpack.c.l.b16 %v182
    %v472 = vunpack.c.l.b16 %v183
    %v473 = vunpack.c.l.b16 %v184
    %v474 = vunpack.c.l.b16 %v185
    %v475 = vpack.c.b16 %v348, %v347
    %v476 = vpack.c.b16 %v350, %v349
    %v477 = vpack.c.b16 %v352, %v351
    %v478 = vpack.c.b16 %v354, %v353
    %v479 = vpack.c.b16 %v356, %v355
    %v480 = vpack.c.b16 %v358, %v357
    %v481 = vpack.c.b16 %v360, %v359
    %v482 = vpack.c.b16 %v362, %v361
    %v483 = vpack.c.b16 %v364, %v363
    %v484 = vpack.c.b16 %v366, %v365
    %v485 = vpack.c.b16 %v368, %v367
    %v486 = vpack.c.b16 %v370, %v369
    %v487 = vpack.c.b16 %v372, %v371
    %v488 = vpack.c.b16 %v374, %v373
    %v489 = vpack.c.b16 %v376, %v375
    %v490 = vpack.c.b16 %v378, %v377
    %v491 = vpack.c.b16 %v380, %v379
    %v492 = vpack.c.b16 %v382, %v381
    %v493 = vpack.c.b16 %v384, %v383
    %v494 = vpack.c.b16 %v386, %v385
    %v495 = vpack.c.b16 %v388, %v387
    %v496 = vpack.c.b16 %v390, %v389
    %v497 = vpack.c.b16 %v392, %v391
    %v498 = vpack.c.b16 %v394, %v393
    %v499 = vpack.c.b16 %v396, %v395
    %v500 = vpack.c.b16 %v398, %v397
    %v501 = vpack.c.b16 %v400, %v399
    %v502 = vpack.c.b16 %v402, %v401
    %v503 = vpack.c.b16 %v404, %v403
    %v504 = vpack.c.b16 %v406, %v405
    %v505 = vpack.c.b16 %v408, %v407
    %v506 = vpack.c.b16 %v410, %v409
    %v507 = vpack.c.b16 %v412, %v411
    %v508 = vpack.c.b16 %v414, %v413
    %v509 = vpack.c.b16 %v416, %v415
    %v510 = vpack.c.b16 %v418, %v417
    %v511 = vpack.c.b16 %v420, %v419
    %v512 = vpack.c.b16 %v422, %v421
    %v513 = vpack.c.b16 %v424, %v423
    %v514 = vpack.c.b16 %v426, %v425
    %v515 = vpack.c.b16 %v428, %v427
    %v516 = vpack.c.b16 %v430, %v429
    %v517 = vpack.c.b16 %v432, %v431
    %v518 = vpack.c.b16 %v434, %v433
    %v519 = vpack.c.b16 %v436, %v435
    %v520 = vpack.c.b16 %v438, %v437
    %v521 = vpack.c.b16 %v440, %v439
    %v522 = vpack.c.b16 %v442, %v441
    %v523 = vpack.c.b16 %v444, %v443
    %v524 = vpack.c.b16 %v446, %v445
    %v525 = vpack.c.b16 %v448, %v447
    %v526 = vpack.c.b16 %v450, %v449
    %v527 = vpack.c.b16 %v452, %v451
    %v528 = vpack.c.b16 %v454, %v453
    %v529 = vpack.c.b16 %v456, %v455
    %v530 = vpack.c.b16 %v458, %v457
    %v531 = vpack.c.b16 %v460, %v459
    %v532 = vpack.c.b16 %v462, %v461
    %v533 = vpack.c.b16 %v464, %v463
    %v534 = vpack.c.b16 %v466, %v465
    %v535 = vpack.c.b16 %v468, %v467
    %v536 = vpack.c.b16 %v470, %v469
    %v537 = vpack.c.b16 %v472, %v471
    %v538 = vpack.c.b16 %v474, %v473
    %603 = vmatprep.subr.bf16.mxu0 0
    %604 = vmatpush1.bf16.msra.mxu0 %v482
    %605 = vmatprep.subr.bf16.mxu0 0
    %606 = vmatpush1.bf16.msra.mxu0 %v481
    %607 = vmatprep.subr.bf16.mxu0 0
    %608 = vmatpush1.bf16.msra.mxu0 %v480
    %609 = vmatprep.subr.bf16.mxu0 0
    %610 = vmatpush1.bf16.msra.mxu0 %v479
    %611 = vmatprep.subr.bf16.mxu0 0
    %612 = vmatpush1.bf16.msra.mxu0 %v478
    %613 = vmatprep.subr.bf16.mxu0 0
    %614 = vmatpush1.bf16.msra.mxu0 %v477
    %615 = vmatprep.subr.bf16.mxu0 0
    %616 = vmatpush1.bf16.msra.mxu0 %v476
    %617 = vmatprep.subr.bf16.mxu0 0
    %618 = vmatpush1.bf16.msra.mxu0 %v475
    %619 = vmatprep.subr.bf16.mxu0 0
    %620 = vmatpush2.bf16.msra.mxu0 %v490
    %621 = vmatprep.subr.bf16.mxu0 0
    %622 = vmatpush2.bf16.msra.mxu0 %v489
    %623 = vmatprep.subr.bf16.mxu0 0
    %624 = vmatpush2.bf16.msra.mxu0 %v488
    %625 = vmatprep.subr.bf16.mxu0 0
    %626 = vmatpush2.bf16.msra.mxu0 %v487
    %627 = vmatprep.subr.bf16.mxu0 0
    %628 = vmatpush2.bf16.msra.mxu0 %v486
    %629 = vmatprep.subr.bf16.mxu0 0
    %630 = vmatpush2.bf16.msra.mxu0 %v485
    %631 = vmatprep.subr.bf16.mxu0 0
    %632 = vmatpush2.bf16.msra.mxu0 %v484
    %633 = vmatprep.subr.bf16.mxu0 0
    %634 = vmatpush2.bf16.msra.mxu0 %v483
    %635 = vmatprep.mubr.bf16.mxu0 %v204
    %636 = vmatmul.mubr.bf16.gmra.mxu0 %v203
    %v637 = vpop.f32.mrf.mxu0
    %v638 = vadd.f32 %v190, %v637
    %v639 = vpop.f32.mrf.mxu0
    %v640 = vpop.f32.mrf.mxu0
    %v641 = vpop.f32.mrf.mxu0
    %642 = vdwg.mxu0
    %643 = vmatprep.subr.bf16.mxu0 0
    %644 = vmatpush1.bf16.msra.mxu0 %v498
    %645 = vmatprep.subr.bf16.mxu0 0
    %646 = vmatpush1.bf16.msra.mxu0 %v497
    %647 = vmatprep.subr.bf16.mxu0 0
    %648 = vmatpush1.bf16.msra.mxu0 %v496
    %649 = vmatprep.subr.bf16.mxu0 0
    %650 = vmatpush1.bf16.msra.mxu0 %v495
    %651 = vmatprep.subr.bf16.mxu0 0
    %652 = vmatpush1.bf16.msra.mxu0 %v494
    %653 = vmatprep.subr.bf16.mxu0 0
    %654 = vmatpush1.bf16.msra.mxu0 %v493
    %655 = vmatprep.subr.bf16.mxu0 0
    %656 = vmatpush1.bf16.msra.mxu0 %v492
    %657 = vmatprep.subr.bf16.mxu0 0
    %658 = vmatpush1.bf16.msra.mxu0 %v491
    %659 = vmatprep.subr.bf16.mxu0 0
    %660 = vmatpush2.bf16.msra.mxu0 %v506
    %661 = vmatprep.subr.bf16.mxu0 0
    %662 = vmatpush2.bf16.msra.mxu0 %v505
    %663 = vmatprep.subr.bf16.mxu0 0
    %664 = vmatpush2.bf16.msra.mxu0 %v504
    %665 = vmatprep.subr.bf16.mxu0 0
    %666 = vmatpush2.bf16.msra.mxu0 %v503
    %667 = vmatprep.subr.bf16.mxu0 0
    %668 = vmatpush2.bf16.msra.mxu0 %v502
    %669 = vmatprep.subr.bf16.mxu0 0
    %670 = vmatpush2.bf16.msra.mxu0 %v501
    %671 = vmatprep.subr.bf16.mxu0 0
    %672 = vmatpush2.bf16.msra.mxu0 %v500
    %673 = vmatprep.subr.bf16.mxu0 0
    %674 = vmatpush2.bf16.msra.mxu0 %v499
    %675 = vmatprep.mubr.bf16.mxu0 %v206
    %676 = vmatmul.mubr.bf16.gmra.mxu0 %v205
    %v677 = vpop.f32.mrf.mxu0
    %v678 = vadd.f32 %v638, %v677
    %v679 = vpop.f32.mrf.mxu0
    %v680 = vpop.f32.mrf.mxu0
    %v681 = vpop.f32.mrf.mxu0
    %682 = vdwg.mxu0
    %683 = vmatprep.subr.bf16.mxu0 0
    %684 = vmatpush1.bf16.msra.mxu0 %v514
    %685 = vmatprep.subr.bf16.mxu0 0
    %686 = vmatpush1.bf16.msra.mxu0 %v513
    %687 = vmatprep.subr.bf16.mxu0 0
    %688 = vmatpush1.bf16.msra.mxu0 %v512
    %689 = vmatprep.subr.bf16.mxu0 0
    %690 = vmatpush1.bf16.msra.mxu0 %v511
    %691 = vmatprep.subr.bf16.mxu0 0
    %692 = vmatpush1.bf16.msra.mxu0 %v510
    %693 = vmatprep.subr.bf16.mxu0 0
    %694 = vmatpush1.bf16.msra.mxu0 %v509
    %695 = vmatprep.subr.bf16.mxu0 0
    %696 = vmatpush1.bf16.msra.mxu0 %v508
    %697 = vmatprep.subr.bf16.mxu0 0
    %698 = vmatpush1.bf16.msra.mxu0 %v507
    %699 = vmatprep.subr.bf16.mxu0 0
    %700 = vmatpush2.bf16.msra.mxu0 %v522
    %701 = vmatprep.subr.bf16.mxu0 0
    %702 = vmatpush2.bf16.msra.mxu0 %v521
    %703 = vmatprep.subr.bf16.mxu0 0
    %704 = vmatpush2.bf16.msra.mxu0 %v520
    %705 = vmatprep.subr.bf16.mxu0 0
    %706 = vmatpush2.bf16.msra.mxu0 %v519
    %707 = vmatprep.subr.bf16.mxu0 0
    %708 = vmatpush2.bf16.msra.mxu0 %v518
    %709 = vmatprep.subr.bf16.mxu0 0
    %710 = vmatpush2.bf16.msra.mxu0 %v517
    %711 = vmatprep.subr.bf16.mxu0 0
    %712 = vmatpush2.bf16.msra.mxu0 %v516
    %713 = vmatprep.subr.bf16.mxu0 0
    %714 = vmatpush2.bf16.msra.mxu0 %v515
    %715 = vmatprep.mubr.bf16.mxu0 %v208
    %716 = vmatmul.mubr.bf16.gmra.mxu0 %v207
    %v717 = vpop.f32.mrf.mxu0
    %v718 = vadd.f32 %v678, %v717
    %v719 = vpop.f32.mrf.mxu0
    %v720 = vpop.f32.mrf.mxu0
    %v721 = vpop.f32.mrf.mxu0
    %722 = vdwg.mxu0
    %723 = vmatprep.subr.bf16.mxu0 0
    %724 = vmatpush1.bf16.msra.mxu0 %v530
    %725 = vmatprep.subr.bf16.mxu0 0
    %726 = vmatpush1.bf16.msra.mxu0 %v529
    %727 = vmatprep.subr.bf16.mxu0 0
    %728 = vmatpush1.bf16.msra.mxu0 %v528
    %729 = vmatprep.subr.bf16.mxu0 0
    %730 = vmatpush1.bf16.msra.mxu0 %v527
    %731 = vmatprep.subr.bf16.mxu0 0
    %732 = vmatpush1.bf16.msra.mxu0 %v526
    %733 = vmatprep.subr.bf16.mxu0 0
    %734 = vmatpush1.bf16.msra.mxu0 %v525
    %735 = vmatprep.subr.bf16.mxu0 0
    %736 = vmatpush1.bf16.msra.mxu0 %v524
    %737 = vmatprep.subr.bf16.mxu0 0
    %738 = vmatpush1.bf16.msra.mxu0 %v523
    %739 = vmatprep.subr.bf16.mxu0 0
    %740 = vmatpush2.bf16.msra.mxu0 %v538
    %741 = vmatprep.subr.bf16.mxu0 0
    %742 = vmatpush2.bf16.msra.mxu0 %v537
    %743 = vmatprep.subr.bf16.mxu0 0
    %744 = vmatpush2.bf16.msra.mxu0 %v536
    %745 = vmatprep.subr.bf16.mxu0 0
    %746 = vmatpush2.bf16.msra.mxu0 %v535
    %747 = vmatprep.subr.bf16.mxu0 0
    %748 = vmatpush2.bf16.msra.mxu0 %v534
    %749 = vmatprep.subr.bf16.mxu0 0
    %750 = vmatpush2.bf16.msra.mxu0 %v533
    %751 = vmatprep.subr.bf16.mxu0 0
    %752 = vmatpush2.bf16.msra.mxu0 %v532
    %753 = vmatprep.subr.bf16.mxu0 0
    %754 = vmatpush2.bf16.msra.mxu0 %v531
    %755 = vmatprep.mubr.bf16.mxu0 %v210
    %756 = vmatmul.mubr.bf16.gmra.mxu0 %v209
    %v757 = vpop.f32.mrf.mxu0
    %v758 = vadd.f32 %v718, %v757
    %v759 = vpop.f32.mrf.mxu0
    %v760 = vpop.f32.mrf.mxu0
    %v761 = vpop.f32.mrf.mxu0
    %762 = vdwg.mxu0
    %v763 = vld [vmem:[%s5] sm:$0xff]
    %v764 = vld [vmem:[%s5 + $0x8] sm:$0xff]
    %v765 = vld [vmem:[%s5 + $0x10] sm:$0xff]
    %v766 = vld [vmem:[%s5 + $0x18] sm:$0xff]
    %v767 = vld [vmem:[%s5 + $0x20] sm:$0xff]
    %v768 = vld [vmem:[%s5 + $0x28] sm:$0xff]
    %v769 = vld [vmem:[%s5 + $0x30] sm:$0xff]
    %v770 = vld [vmem:[%s5 + $0x38] sm:$0xff]
    %v771 = vld [vmem:[%s5 + $0x40] sm:$0xff]
    %v772 = vld [vmem:[%s5 + $0x48] sm:$0xff]
    %v773 = vld [vmem:[%s5 + $0x50] sm:$0xff]
    %v774 = vld [vmem:[%s5 + $0x58] sm:$0xff]
    %v775 = vld [vmem:[%s5 + $0x60] sm:$0xff]
    %v776 = vld [vmem:[%s5 + $0x68] sm:$0xff]
    %v777 = vld [vmem:[%s5 + $0x70] sm:$0xff]
    %v778 = vld [vmem:[%s5 + $0x78] sm:$0xff]
    %v779 = vld [vmem:[%s5 + $0x80] sm:$0xff]
    %v780 = vld [vmem:[%s5 + $0x88] sm:$0xff]
    %v781 = vld [vmem:[%s5 + $0x90] sm:$0xff]
    %v782 = vld [vmem:[%s5 + $0x98] sm:$0xff]
    %v783 = vld [vmem:[%s5 + $0xa0] sm:$0xff]
    %v784 = vld [vmem:[%s5 + $0xa8] sm:$0xff]
    %v785 = vld [vmem:[%s5 + $0xb0] sm:$0xff]
    %v786 = vld [vmem:[%s5 + $0xb8] sm:$0xff]
    %v787 = vld [vmem:[%s5 + $0xc0] sm:$0xff]
    %v788 = vld [vmem:[%s5 + $0xc8] sm:$0xff]
    %v789 = vld [vmem:[%s5 + $0xd0] sm:$0xff]
    %v790 = vld [vmem:[%s5 + $0xd8] sm:$0xff]
    %v791 = vld [vmem:[%s5 + $0xe0] sm:$0xff]
    %v792 = vld [vmem:[%s5 + $0xe8] sm:$0xff]
    %v793 = vld [vmem:[%s5 + $0xf0] sm:$0xff]
    %v794 = vld [vmem:[%s5 + $0xf8] sm:$0xff]
    %795 = vmatprep.subr.mxu0 0.0
    %796 = vmatpush1.msra.mxu0 %v778
    %797 = vmatprep.subr.mxu0 0.0
    %798 = vmatpush1.msra.mxu0 %v777
    %799 = vmatprep.subr.mxu0 0.0
    %800 = vmatpush1.msra.mxu0 %v776
    %801 = vmatprep.subr.mxu0 0.0
    %802 = vmatpush1.msra.mxu0 %v775
    %803 = vmatprep.subr.mxu0 0.0
    %804 = vmatpush1.msra.mxu0 %v774
    %805 = vmatprep.subr.mxu0 0.0
    %806 = vmatpush1.msra.mxu0 %v773
    %807 = vmatprep.subr.mxu0 0.0
    %808 = vmatpush1.msra.mxu0 %v772
    %809 = vmatprep.subr.mxu0 0.0
    %810 = vmatpush1.msra.mxu0 %v771
    %811 = vmatprep.subr.mxu0 0.0
    %812 = vmatpush1.msra.mxu0 %v770
    %813 = vmatprep.subr.mxu0 0.0
    %814 = vmatpush1.msra.mxu0 %v769
    %815 = vmatprep.subr.mxu0 0.0
    %816 = vmatpush1.msra.mxu0 %v768
    %817 = vmatprep.subr.mxu0 0.0
    %818 = vmatpush1.msra.mxu0 %v767
    %819 = vmatprep.subr.mxu0 0.0
    %820 = vmatpush1.msra.mxu0 %v766
    %821 = vmatprep.subr.mxu0 0.0
    %822 = vmatpush1.msra.mxu0 %v765
    %823 = vmatprep.subr.mxu0 0.0
    %824 = vmatpush1.msra.mxu0 %v764
    %825 = vmatprep.subr.mxu0 0.0
    %826 = vmatpush1.msra.mxu0 %v763
    %827 = vmatprep.subr.mxu0 0.0
    %828 = vmatpush2.msra.mxu0 %v794
    %829 = vmatprep.subr.mxu0 0.0
    %830 = vmatpush2.msra.mxu0 %v793
    %831 = vmatprep.subr.mxu0 0.0
    %832 = vmatpush2.msra.mxu0 %v792
    %833 = vmatprep.subr.mxu0 0.0
    %834 = vmatpush2.msra.mxu0 %v791
    %835 = vmatprep.subr.mxu0 0.0
    %836 = vmatpush2.msra.mxu0 %v790
    %837 = vmatprep.subr.mxu0 0.0
    %838 = vmatpush2.msra.mxu0 %v789
    %839 = vmatprep.subr.mxu0 0.0
    %840 = vmatpush2.msra.mxu0 %v788
    %841 = vmatprep.subr.mxu0 0.0
    %842 = vmatpush2.msra.mxu0 %v787
    %843 = vmatprep.subr.mxu0 0.0
    %844 = vmatpush2.msra.mxu0 %v786
    %845 = vmatprep.subr.mxu0 0.0
    %846 = vmatpush2.msra.mxu0 %v785
    %847 = vmatprep.subr.mxu0 0.0
    %848 = vmatpush2.msra.mxu0 %v784
    %849 = vmatprep.subr.mxu0 0.0
    %850 = vmatpush2.msra.mxu0 %v783
    %851 = vmatprep.subr.mxu0 0.0
    %852 = vmatpush2.msra.mxu0 %v782
    %853 = vmatprep.subr.mxu0 0.0
    %854 = vmatpush2.msra.mxu0 %v781
    %855 = vmatprep.subr.mxu0 0.0
    %856 = vmatpush2.msra.mxu0 %v780
    %857 = vmatprep.subr.mxu0 0.0
    %858 = vmatpush2.msra.mxu0 %v779
    %859 = vmatprep.mubr.f32.mxu0 %v758
    %860 = vmatmul.mubr.f32.gmra.mxu0 %v51
    %v861 = vpop.f32.mrf.mxu0
    %v862 = vadd.f32 0.0, %v861
    %v863 = vpop.f32.mrf.mxu0
    %864 = vdwg.mxu0
    %866 = vrot.lane.b32.xlu0 %v52, 32
    %v867 = vpop.permute.xlu0 %866
    %vm869 = vcmask 261120
    %v870 = vsel %vm869, %v862, %v867
    %v871 = vmax.f32 %v870, 0.0
    %vm872 = vcmp.ne.f32.partialorder %v870, %v870
    %v873 = vadd.f32 %v870, 0.0
    %v874 = vand.u32 2147483647, %v870
    %v875 = vsub.f32 0.0, %v874
    %v876 = vmul.f32 %v875, 1.442695
    %v877 = vpow.pop %v876
    %v878 = vadd.f32 %v877, 1.0
    %v879 = vlog2.pop %v878
    %v880 = vmul.f32 %v879, 0.6931472
    %v881 = vmul.f32 -0.5, %v877
    %v882 = vadd.f32 %v881, 1.0
    %v883 = vmul.f32 %v882, %v877
    %v884 = vand.u32 2147483647, %v877
    %vm885 = vcmp.lt.f32.partialorder %v884, 0.0004427343
    %v886 = vsel %vm885, %v883, %v880
    %v887 = vadd.f32 %v871, %v886
    %v888 = vsel %vm872, %v873, %v887
    %v889 = vld [vmem:[%s8] sm:$0xff]
    %v890 = vld [vmem:[%s8 + $0x8] sm:$0xff]
    %v891 = vld [vmem:[%s8 + $0x10] sm:$0xff]
    %v892 = vld [vmem:[%s8 + $0x18] sm:$0xff]
    %v893 = vld [vmem:[%s8 + $0x20] sm:$0xf]
    %v894 = vld [vmem:[%s7 + $0x2] sm:$0x1]
    %v895 = vlaneseq
    %v896 = vshrl.u32 %v895, 7
    %v897 = vsub.s32 0, %v896
    %v898 = vrot.slane %v894, %v897
    %vm899 = vcmask 293888
    %v901 = vsel %vm899, %v888, 0
    %vm903 = vcmask 1043456
    %v905 = vsel %vm903, %v893, 0
    %907 = vmatprep.subr.mxu0 0.0
    %908 = vmatpush1.msra.mxu0 0.0
    %909 = vmatprep.subr.mxu0 0.0
    %910 = vmatpush1.msra.mxu0 0.0
    %911 = vmatprep.subr.mxu0 0.0
    %912 = vmatpush1.msra.mxu0 0.0
    %913 = vmatprep.subr.mxu0 0.0
    %914 = vmatpush1.msra.mxu0 0.0
    %915 = vmatprep.subr.mxu0 0.0
    %916 = vmatpush1.msra.mxu0 0.0
    %917 = vmatprep.subr.mxu0 0.0
    %918 = vmatpush1.msra.mxu0 0.0
    %919 = vmatprep.subr.mxu0 0.0
    %920 = vmatpush1.msra.mxu0 0.0
    %921 = vmatprep.subr.mxu0 0.0
    %922 = vmatpush1.msra.mxu0 0.0
    %923 = vmatprep.subr.mxu0 0.0
    %924 = vmatpush1.msra.mxu0 0.0
    %925 = vmatprep.subr.mxu0 0.0
    %926 = vmatpush1.msra.mxu0 0.0
    %927 = vmatprep.subr.mxu0 0.0
    %928 = vmatpush1.msra.mxu0 0.0
    %929 = vmatprep.subr.mxu0 0.0
    %930 = vmatpush1.msra.mxu0 %v905
    %931 = vmatprep.subr.mxu0 0.0
    %932 = vmatpush1.msra.mxu0 %v892
    %933 = vmatprep.subr.mxu0 0.0
    %934 = vmatpush1.msra.mxu0 %v891
    %935 = vmatprep.subr.mxu0 0.0
    %936 = vmatpush1.msra.mxu0 %v890
    %937 = vmatprep.subr.mxu0 0.0
    %938 = vmatpush1.msra.mxu0 %v889
    %939 = vmatprep.subr.mxu0 0.0
    %940 = vmatpush2.msra.mxu0 0.0
    %941 = vmatprep.subr.mxu0 0.0
    %942 = vmatpush2.msra.mxu0 0.0
    %943 = vmatprep.subr.mxu0 0.0
    %944 = vmatpush2.msra.mxu0 0.0
    %945 = vmatprep.subr.mxu0 0.0
    %946 = vmatpush2.msra.mxu0 0.0
    %947 = vmatprep.subr.mxu0 0.0
    %948 = vmatpush2.msra.mxu0 0.0
    %949 = vmatprep.subr.mxu0 0.0
    %950 = vmatpush2.msra.mxu0 0.0
    %951 = vmatprep.subr.mxu0 0.0
    %952 = vmatpush2.msra.mxu0 0.0
    %953 = vmatprep.subr.mxu0 0.0
    %954 = vmatpush2.msra.mxu0 0.0
    %955 = vmatprep.subr.mxu0 0.0
    %956 = vmatpush2.msra.mxu0 0.0
    %957 = vmatprep.subr.mxu0 0.0
    %958 = vmatpush2.msra.mxu0 0.0
    %959 = vmatprep.subr.mxu0 0.0
    %960 = vmatpush2.msra.mxu0 0.0
    %961 = vmatprep.subr.mxu0 0.0
    %962 = vmatpush2.msra.mxu0 0.0
    %963 = vmatprep.subr.mxu0 0.0
    %964 = vmatpush2.msra.mxu0 0.0
    %965 = vmatprep.subr.mxu0 0.0
    %966 = vmatpush2.msra.mxu0 0.0
    %967 = vmatprep.subr.mxu0 0.0
    %968 = vmatpush2.msra.mxu0 0.0
    %969 = vmatprep.subr.mxu0 0.0
    %970 = vmatpush2.msra.mxu0 0.0
    %971 = vmatprep.mubr.f32.mxu0 0.0
    %972 = vmatmul.mubr.f32.gmra.mxu0 %v901
    %v973 = vpop.f32.mrf.mxu0
    %v974 = vadd.f32 %v898, %v973
    %v975 = vpop.f32.mrf.mxu0
    %976 = vdwg.mxu0
    %vm977 = vcmask 130048
    %v978 = vsel %vm977, %v974, 0.0
    %v979 = vrot.slane %v978, 4
    %v980 = vadd.f32 %v978, %v979
    %v981 = vrot.slane %v980, 2
    %v982 = vadd.f32 %v980, %v981
    %v983 = vrot.slane %v982, 1
    %v984 = vadd.f32 %v982, %v983
    %v985 = vrcp.pop 8.0
    %v986 = vmul.f32 %v984, %v985
    %v987 = vsub.f32 %v974, %v986
    %v988 = vmul.f32 %v987, %v987
    %v989 = vsel %vm977, %v988, 0.0
    %v990 = vrot.slane %v989, 4
    %v991 = vadd.f32 %v989, %v990
    %v992 = vrot.slane %v991, 2
    %v993 = vadd.f32 %v991, %v992
    %v994 = vrot.slane %v993, 1
    %v995 = vadd.f32 %v993, %v994
    %v996 = vmul.f32 %v995, %v985
    %v997 = vadd.f32 %v996, 0.001
    %v998 = vrsqrt.pop %v997
    %v999 = vmul.f32 %v987, %v998
    %vm1000 = vcmask 261248
    %v1001 = vsel %vm1000, %v974, 0.0
    %v1002 = vrot.slane %v1001, 4
    %v1003 = vadd.f32 %v1001, %v1002
    %v1004 = vrot.slane %v1003, 2
    %v1005 = vadd.f32 %v1003, %v1004
    %v1006 = vrot.slane %v1005, 1
    %v1007 = vadd.f32 %v1005, %v1006
    %v1008 = vmul.f32 %v1007, %v985
    %v1009 = vsub.f32 %v974, %v1008
    %v1010 = vmul.f32 %v1009, %v1009
    %v1011 = vsel %vm1000, %v1010, 0.0
    %v1012 = vrot.slane %v1011, 4
    %v1013 = vadd.f32 %v1011, %v1012
    %v1014 = vrot.slane %v1013, 2
    %v1015 = vadd.f32 %v1013, %v1014
    %v1016 = vrot.slane %v1015, 1
    %v1017 = vadd.f32 %v1015, %v1016
    %v1018 = vmul.f32 %v1017, %v985
    %v1019 = vadd.f32 %v1018, 0.001
    %v1020 = vrsqrt.pop %v1019
    %v1021 = vmul.f32 %v1009, %v1020
    %v1022 = vmul.f32 %v1021, 0.5
    %v1023 = vmul.f32 %v1022, 1.442695
    %v1024 = vpow.pop %v1023
    %v1025 = vmul.f32 %v1024, %v1024
    %1027 = vrot.lane.b32.xlu0 %v53, 16
    %v1028 = vpop.permute.xlu0 %1027
    %v1030 = vmul.f32 %v1024, %v1028
    %1032 = vrot.lane.b32.xlu0 %v1030, 112
    %v1033 = vpop.permute.xlu0 %1032
    %v1035 = vadd.f32 %v999, %v1033
    %v1036 = vsel %vm977, %v1035, -inf
    %1037 = vmax.xlane.f32.xlu0 %v1036
    %v1038 = vpop.xlane.xlu0 %1037
    %v1039 = vsub.f32 %v1035, %v1038
    %v1040 = vmul.f32 %v1039, 1.442695
    %v1041 = vpow.pop %v1040
    %v1042 = vsel %vm977, %v1041, 0.0
    %1043 = vadd.xlane.f32.xlu0 %v1042
    %v1044 = vpop.xlane.xlu0 %1043
    %v1045 = vrcp.pop %v1044
    %v1046 = vmul.f32 %v1041, %v1045
    %v1047 = vld [vmem:[%s6] sm:$0xff]
    %v1048 = vld [vmem:[%s6 + $0x8] sm:$0xff]
    %v1049 = vld [vmem:[%s7 + $0x1] sm:$0x1]
    %v1050 = vlaneseq
    %v1051 = vshrl.u32 %v1050, 7
    %v1052 = vsub.s32 0, %v1051
    %v1053 = vrot.slane %v1049, %v1052
    %v1055 = vsel %vm977, %v1046, 0
    %1057 = vmatprep.subr.mxu0 0.0
    %1058 = vmatpush1.msra.mxu0 0.0
    %1059 = vmatprep.subr.mxu0 0.0
    %1060 = vmatpush1.msra.mxu0 0.0
    %1061 = vmatprep.subr.mxu0 0.0
    %1062 = vmatpush1.msra.mxu0 0.0
    %1063 = vmatprep.subr.mxu0 0.0
    %1064 = vmatpush1.msra.mxu0 0.0
    %1065 = vmatprep.subr.mxu0 0.0
    %1066 = vmatpush1.msra.mxu0 0.0
    %1067 = vmatprep.subr.mxu0 0.0
    %1068 = vmatpush1.msra.mxu0 0.0
    %1069 = vmatprep.subr.mxu0 0.0
    %1070 = vmatpush1.msra.mxu0 0.0
    %1071 = vmatprep.subr.mxu0 0.0
    %1072 = vmatpush1.msra.mxu0 0.0
    %1073 = vmatprep.subr.mxu0 0.0
    %1074 = vmatpush1.msra.mxu0 0.0
    %1075 = vmatprep.subr.mxu0 0.0
    %1076 = vmatpush1.msra.mxu0 0.0
    %1077 = vmatprep.subr.mxu0 0.0
    %1078 = vmatpush1.msra.mxu0 0.0
    %1079 = vmatprep.subr.mxu0 0.0
    %1080 = vmatpush1.msra.mxu0 0.0
    %1081 = vmatprep.subr.mxu0 0.0
    %1082 = vmatpush1.msra.mxu0 0.0
    %1083 = vmatprep.subr.mxu0 0.0
    %1084 = vmatpush1.msra.mxu0 0.0
    %1085 = vmatprep.subr.mxu0 0.0
    %1086 = vmatpush1.msra.mxu0 %v1048
    %1087 = vmatprep.subr.mxu0 0.0
    %1088 = vmatpush1.msra.mxu0 %v1047
    %1089 = vmatprep.subr.mxu0 0.0
    %1090 = vmatpush2.msra.mxu0 0.0
    %1091 = vmatprep.subr.mxu0 0.0
    %1092 = vmatpush2.msra.mxu0 0.0
    %1093 = vmatprep.subr.mxu0 0.0
    %1094 = vmatpush2.msra.mxu0 0.0
    %1095 = vmatprep.subr.mxu0 0.0
    %1096 = vmatpush2.msra.mxu0 0.0
    %1097 = vmatprep.subr.mxu0 0.0
    %1098 = vmatpush2.msra.mxu0 0.0
    %1099 = vmatprep.subr.mxu0 0.0
    %1100 = vmatpush2.msra.mxu0 0.0
    %1101 = vmatprep.subr.mxu0 0.0
    %1102 = vmatpush2.msra.mxu0 0.0
    %1103 = vmatprep.subr.mxu0 0.0
    %1104 = vmatpush2.msra.mxu0 0.0
    %1105 = vmatprep.subr.mxu0 0.0
    %1106 = vmatpush2.msra.mxu0 0.0
    %1107 = vmatprep.subr.mxu0 0.0
    %1108 = vmatpush2.msra.mxu0 0.0
    %1109 = vmatprep.subr.mxu0 0.0
    %1110 = vmatpush2.msra.mxu0 0.0
    %1111 = vmatprep.subr.mxu0 0.0
    %1112 = vmatpush2.msra.mxu0 0.0
    %1113 = vmatprep.subr.mxu0 0.0
    %1114 = vmatpush2.msra.mxu0 0.0
    %1115 = vmatprep.subr.mxu0 0.0
    %1116 = vmatpush2.msra.mxu0 0.0
    %1117 = vmatprep.subr.mxu0 0.0
    %1118 = vmatpush2.msra.mxu0 0.0
    %1119 = vmatprep.subr.mxu0 0.0
    %1120 = vmatpush2.msra.mxu0 0.0
    %1121 = vmatprep.mubr.f32.mxu0 0.0
    %1122 = vmatmul.mubr.f32.gmra.mxu0 %v1055
    %v1123 = vpop.f32.mrf.mxu0
    %v1124 = vadd.f32 %v1053, %v1123
    %v1125 = vpop.f32.mrf.mxu0
    %1126 = vdwg.mxu0
    %v1127 = vrot.slane %v1124, 4
    %v1128 = vadd.f32 %v1124, %v1127
    %v1129 = vrot.slane %v1128, 2
    %v1130 = vadd.f32 %v1128, %v1129
    %v1131 = vrot.slane %v1130, 1
    %v1132 = vadd.f32 %v1130, %v1131
    %v1133 = vmul.f32 %v1132, %v985
    %v1134 = vsub.f32 %v1124, %v1133
    %v1135 = vmul.f32 %v1134, %v1134
    %v1136 = vrot.slane %v1135, 4
    %v1137 = vadd.f32 %v1135, %v1136
    %v1138 = vrot.slane %v1137, 2
    %v1139 = vadd.f32 %v1137, %v1138
    %v1140 = vrot.slane %v1139, 1
    %v1141 = vadd.f32 %v1139, %v1140
    %v1142 = vmul.f32 %v1141, %v985
    %v1143 = vadd.f32 %v1142, 0.001
    %v1144 = vrsqrt.pop %v1143
    %v1145 = vmul.f32 %v1134, %v1144
    %1146 = vmax.xlane.f32.xlu0 %v1145
    %v1147 = vpop.xlane.xlu0 %1146
    %v1148 = vsub.f32 %v1145, %v1147
    %v1149 = vmul.f32 %v1148, 1.442695
    %v1150 = vpow.pop %v1149
    %1151 = vadd.xlane.f32.xlu0 %v1150
    %v1152 = vpop.xlane.xlu0 %1151
    %v1153 = vrcp.pop %v1152
    %v1154 = vmul.f32 %v1150, %v1153
    %v1155 = vlog2.pop %v1152
    %v1156 = vmul.f32 %v1155, 0.6931472
    %v1157 = vsub.f32 %v1148, %v1156
    %v1158 = vld [vmem:[%s8 + $0x28] sm:$0xff]
    %v1159 = vld [vmem:[%s8 + $0x30] sm:$0xff]
    %v1160 = vld [vmem:[%s8 + $0x38] sm:$0xff]
    %v1161 = vld [vmem:[%s8 + $0x40] sm:$0xff]
    %v1162 = vld [vmem:[%s7 + $0x3] sm:$0x1]
    %v1163 = vlaneseq
    %v1164 = vshrl.u32 %v1163, 7
    %v1165 = vsub.s32 0, %v1164
    %v1166 = vrot.slane %v1162, %v1165
    %1167 = vmatprep.subr.mxu0 0.0
    %1168 = vmatpush1.msra.mxu0 0.0
    %1169 = vmatprep.subr.mxu0 0.0
    %1170 = vmatpush1.msra.mxu0 0.0
    %1171 = vmatprep.subr.mxu0 0.0
    %1172 = vmatpush1.msra.mxu0 0.0
    %1173 = vmatprep.subr.mxu0 0.0
    %1174 = vmatpush1.msra.mxu0 0.0
    %1175 = vmatprep.subr.mxu0 0.0
    %1176 = vmatpush1.msra.mxu0 0.0
    %1177 = vmatprep.subr.mxu0 0.0
    %1178 = vmatpush1.msra.mxu0 0.0
    %1179 = vmatprep.subr.mxu0 0.0
    %1180 = vmatpush1.msra.mxu0 0.0
    %1181 = vmatprep.subr.mxu0 0.0
    %1182 = vmatpush1.msra.mxu0 0.0
    %1183 = vmatprep.subr.mxu0 0.0
    %1184 = vmatpush1.msra.mxu0 0.0
    %1185 = vmatprep.subr.mxu0 0.0
    %1186 = vmatpush1.msra.mxu0 0.0
    %1187 = vmatprep.subr.mxu0 0.0
    %1188 = vmatpush1.msra.mxu0 0.0
    %1189 = vmatprep.subr.mxu0 0.0
    %1190 = vmatpush1.msra.mxu0 0.0
    %1191 = vmatprep.subr.mxu0 0.0
    %1192 = vmatpush1.msra.mxu0 0.0
    %1193 = vmatprep.subr.mxu0 0.0
    %1194 = vmatpush1.msra.mxu0 0.0
    %1195 = vmatprep.subr.mxu0 0.0
    %1196 = vmatpush1.msra.mxu0 %v1159
    %1197 = vmatprep.subr.mxu0 0.0
    %1198 = vmatpush1.msra.mxu0 %v1158
    %1199 = vmatprep.subr.mxu0 0.0
    %1200 = vmatpush2.msra.mxu0 0.0
    %1201 = vmatprep.subr.mxu0 0.0
    %1202 = vmatpush2.msra.mxu0 0.0
    %1203 = vmatprep.subr.mxu0 0.0
    %1204 = vmatpush2.msra.mxu0 0.0
    %1205 = vmatprep.subr.mxu0 0.0
    %1206 = vmatpush2.msra.mxu0 0.0
    %1207 = vmatprep.subr.mxu0 0.0
    %1208 = vmatpush2.msra.mxu0 0.0
    %1209 = vmatprep.subr.mxu0 0.0
    %1210 = vmatpush2.msra.mxu0 0.0
    %1211 = vmatprep.subr.mxu0 0.0
    %1212 = vmatpush2.msra.mxu0 0.0
    %1213 = vmatprep.subr.mxu0 0.0
    %1214 = vmatpush2.msra.mxu0 0.0
    %1215 = vmatprep.subr.mxu0 0.0
    %1216 = vmatpush2.msra.mxu0 0.0
    %1217 = vmatprep.subr.mxu0 0.0
    %1218 = vmatpush2.msra.mxu0 0.0
    %1219 = vmatprep.subr.mxu0 0.0
    %1220 = vmatpush2.msra.mxu0 0.0
    %1221 = vmatprep.subr.mxu0 0.0
    %1222 = vmatpush2.msra.mxu0 0.0
    %1223 = vmatprep.subr.mxu0 0.0
    %1224 = vmatpush2.msra.mxu0 0.0
    %1225 = vmatprep.subr.mxu0 0.0
    %1226 = vmatpush2.msra.mxu0 0.0
    %1227 = vmatprep.subr.mxu0 0.0
    %1228 = vmatpush2.msra.mxu0 0.0
    %1229 = vmatprep.subr.mxu0 0.0
    %1230 = vmatpush2.msra.mxu0 0.0
    %1231 = vmatprep.mubr.f32.mxu0 0.0
    %1232 = vmatmul.mubr.f32.gmra.mxu0 %v1055
    %v1233 = vpop.f32.mrf.mxu0
    %v1234 = vadd.f32 %v1166, %v1233
    %v1235 = vpop.f32.mrf.mxu0
    %1236 = vdwg.mxu0
    %v1237 = vmax.f32 %v1234, 0.0
    %vm1238 = vcmp.ne.f32.partialorder %v1234, %v1234
    %v1239 = vadd.f32 %v1234, 0.0
    %v1240 = vand.u32 2147483647, %v1234
    %v1241 = vsub.f32 0.0, %v1240
    %v1242 = vmul.f32 %v1241, 1.442695
    %v1243 = vpow.pop %v1242
    %v1244 = vadd.f32 %v1243, 1.0
    %v1245 = vlog2.pop %v1244
    %v1246 = vmul.f32 %v1245, 0.6931472
    %v1247 = vmul.f32 -0.5, %v1243
    %v1248 = vadd.f32 %v1247, 1.0
    %v1249 = vmul.f32 %v1248, %v1243
    %v1250 = vand.u32 2147483647, %v1243
    %vm1251 = vcmp.lt.f32.partialorder %v1250, 0.0004427343
    %v1252 = vsel %vm1251, %v1249, %v1246
    %v1253 = vadd.f32 %v1237, %v1252
    %v1254 = vsel %vm1238, %v1239, %v1253
    %v1255 = vld [vmem:[%s7 + $0x4] sm:$0x1]
    %v1256 = vlaneseq
    %v1257 = vshrl.u32 %v1256, 7
    %v1258 = vsub.s32 0, %v1257
    %v1259 = vrot.slane %v1255, %v1258
    %v1261 = vsel %vm977, %v1254, 0
    %1263 = vmatprep.subr.mxu0 0.0
    %1264 = vmatpush1.msra.mxu0 0.0
    %1265 = vmatprep.subr.mxu0 0.0
    %1266 = vmatpush1.msra.mxu0 0.0
    %1267 = vmatprep.subr.mxu0 0.0
    %1268 = vmatpush1.msra.mxu0 0.0
    %1269 = vmatprep.subr.mxu0 0.0
    %1270 = vmatpush1.msra.mxu0 0.0
    %1271 = vmatprep.subr.mxu0 0.0
    %1272 = vmatpush1.msra.mxu0 0.0
    %1273 = vmatprep.subr.mxu0 0.0
    %1274 = vmatpush1.msra.mxu0 0.0
    %1275 = vmatprep.subr.mxu0 0.0
    %1276 = vmatpush1.msra.mxu0 0.0
    %1277 = vmatprep.subr.mxu0 0.0
    %1278 = vmatpush1.msra.mxu0 0.0
    %1279 = vmatprep.subr.mxu0 0.0
    %1280 = vmatpush1.msra.mxu0 0.0
    %1281 = vmatprep.subr.mxu0 0.0
    %1282 = vmatpush1.msra.mxu0 0.0
    %1283 = vmatprep.subr.mxu0 0.0
    %1284 = vmatpush1.msra.mxu0 0.0
    %1285 = vmatprep.subr.mxu0 0.0
    %1286 = vmatpush1.msra.mxu0 0.0
    %1287 = vmatprep.subr.mxu0 0.0
    %1288 = vmatpush1.msra.mxu0 0.0
    %1289 = vmatprep.subr.mxu0 0.0
    %1290 = vmatpush1.msra.mxu0 0.0
    %1291 = vmatprep.subr.mxu0 0.0
    %1292 = vmatpush1.msra.mxu0 %v1161
    %1293 = vmatprep.subr.mxu0 0.0
    %1294 = vmatpush1.msra.mxu0 %v1160
    %1295 = vmatprep.subr.mxu0 0.0
    %1296 = vmatpush2.msra.mxu0 0.0
    %1297 = vmatprep.subr.mxu0 0.0
    %1298 = vmatpush2.msra.mxu0 0.0
    %1299 = vmatprep.subr.mxu0 0.0
    %1300 = vmatpush2.msra.mxu0 0.0
    %1301 = vmatprep.subr.mxu0 0.0
    %1302 = vmatpush2.msra.mxu0 0.0
    %1303 = vmatprep.subr.mxu0 0.0
    %1304 = vmatpush2.msra.mxu0 0.0
    %1305 = vmatprep.subr.mxu0 0.0
    %1306 = vmatpush2.msra.mxu0 0.0
    %1307 = vmatprep.subr.mxu0 0.0
    %1308 = vmatpush2.msra.mxu0 0.0
    %1309 = vmatprep.subr.mxu0 0.0
    %1310 = vmatpush2.msra.mxu0 0.0
    %1311 = vmatprep.subr.mxu0 0.0
    %1312 = vmatpush2.msra.mxu0 0.0
    %1313 = vmatprep.subr.mxu0 0.0
    %1314 = vmatpush2.msra.mxu0 0.0
    %1315 = vmatprep.subr.mxu0 0.0
    %1316 = vmatpush2.msra.mxu0 0.0
    %1317 = vmatprep.subr.mxu0 0.0
    %1318 = vmatpush2.msra.mxu0 0.0
    %1319 = vmatprep.subr.mxu0 0.0
    %1320 = vmatpush2.msra.mxu0 0.0
    %1321 = vmatprep.subr.mxu0 0.0
    %1322 = vmatpush2.msra.mxu0 0.0
    %1323 = vmatprep.subr.mxu0 0.0
    %1324 = vmatpush2.msra.mxu0 0.0
    %1325 = vmatprep.subr.mxu0 0.0
    %1326 = vmatpush2.msra.mxu0 0.0
    %1327 = vmatprep.mubr.f32.mxu0 0.0
    %1328 = vmatmul.mubr.f32.gmra.mxu0 %v1261
    %v1329 = vpop.f32.mrf.mxu0
    %v1330 = vadd.f32 %v1259, %v1329
    %v1331 = vpop.f32.mrf.mxu0
    %1332 = vdwg.mxu0
    %vm1333 = vcmask 31744
    %v1334 = vsel %vm1333, %v1330, -inf
    %1335 = vmax.xlane.f32.xlu0 %v1334
    %v1336 = vpop.xlane.xlu0 %1335
    %v1337 = vsub.f32 %v1330, %v1336
    %v1338 = vmul.f32 %v1337, 1.442695
    %v1339 = vpow.pop %v1338
    %v1340 = vsel %vm1333, %v1339, 0.0
    %1341 = vadd.xlane.f32.xlu0 %v1340
    %v1342 = vpop.xlane.xlu0 %1341
    %v1343 = vrcp.pop %v1342
    %v1344 = vmul.f32 %v1339, %v1343
    %v1345 = vlog2.pop %v1342
    %v1346 = vmul.f32 %v1345, 0.6931472
    %v1347 = vsub.f32 %v1337, %v1346
    %v1348 = vmul.f32 %v51, %v1157
    %1349 = vadd.xlane.f32.xlu0 %v1348
    %v1350 = vpop.xlane.xlu0 %1349
    %v1351 = vsub.f32 0.0, %v1350
    %v1352 = vmul.f32 %v52, %v1347
    %v1353 = vsel %vm1333, %v1352, 0.0
    %1354 = vadd.xlane.f32.xlu0 %v1353
    %v1355 = vpop.xlane.xlu0 %1354
    %v1356 = vsub.f32 %v1351, %v1355
    %v1357 = vld [vmem:[%s7 + $0x5] sm:$0x1]
    %v1358 = vld [vmem:[%s7 + $0x6] sm:$0x1]
    %v1359 = vld [vmem:[%s7 + $0x7] sm:$0x1]
    %v1360 = vlaneseq
    %v1361 = vshrl.u32 %v1360, 7
    %v1362 = vsub.s32 0, %v1361
    %v1363 = vrot.slane %v1357, %v1362
    %v1364 = vsub.f32 %v999, %v1363
    %v1365 = vlaneseq
    %v1366 = vshrl.u32 %v1365, 7
    %v1367 = vsub.s32 0, %v1366
    %v1368 = vrot.slane %v1359, %v1367
    %1370 = vrot.lane.b32.xlu0 %v1368, 16
    %v1371 = vpop.permute.xlu0 %1370
    %v1373 = vmul.f32 %v1025, %v1371
    %v1374 = vmul.f32 %v1364, %v1364
    %v1375 = vmul.f32 %v1374, %v1368
    %1377 = vrot.lane.b32.xlu0 %v1375, 16
    %v1378 = vpop.permute.xlu0 %1377
    %v1380 = vadd.f32 %v1373, %v1378
    %v1381 = vlaneseq
    %v1382 = vshrl.u32 %v1381, 7
    %v1383 = vsub.s32 0, %v1382
    %v1384 = vrot.slane %v1358, %v1383
    %1386 = vrot.lane.b32.xlu0 %v1021, 112
    %v1387 = vpop.permute.xlu0 %1386
    %v1389 = vsub.f32 %v1384, %v1387
    %1391 = vrot.lane.b32.xlu0 %v1389, 16
    %v1392 = vpop.permute.xlu0 %1391
    %v1394 = vadd.f32 %v1380, %v1392
    %1396 = vrot.lane.b32.xlu0 %v1394, 112
    %v1397 = vpop.permute.xlu0 %1396
    %v1399 = vsel %vm977, %v1397, 0.0
    %1400 = vadd.xlane.f32.xlu0 %v1399
    %v1401 = vpop.xlane.xlu0 %1400
    %v1402 = vsub.f32 %v1401, 16.0
    %v1403 = vmul.f32 %v1402, 0.5
    %v1404 = vadd.f32 %v1356, %v1403
    %1405 = vst [vmem:[#allocation5] sm:$0xff] %v1154
    %1407 = vrot.lane.b32.xlu0 %v1344, 16
    %v1408 = vpop.permute.xlu0 %1407
    %v1410 = vsel %vm977, %v1046, %v1408
    %vm1411 = vcmask 162816
    %v1412 = vsel %vm1411, %v1410, %v1404
    %vm1413 = vcmask 171008
    %v1414 = vsel %vm1413, %v1412, %v1356
    %vm1415 = vcmask 179200
    %v1416 = vsel %vm1415, %v1414, %v1403
    %vm1417 = vcmask 187392
    %v1418 = vsel %vm1417, %v1416, 0.0
    %1419 = vst [vmem:[#allocation6] sm:$0xff] %v1418
    // Predicated region
    $region42: #{tpu_custom_call.1} parent=1 // pred_check
      _
    $region43: #{tpu_custom_call.1} parent=1 // pred_check_branch
      %1421 = sbr.rel (0) target = $region45
    $region44: #{tpu_custom_call.1} parent=1 // pred_region
      %s1423 = ssub.s32 128, 128
      %1424 = vsyncadd [#allocation4], %s1423
      %s1426 = sshll.u32 [#allocation5], 4
      %s1427 = int_to_ptr.vmem [resolvable:$true] %s1426
      %1429 = dma.vmem_to_hbm [thread:$0]  %s1427, 128, %s9, [#allocation4]
    $region45: #{tpu_custom_call.1} parent=1 // pred_fallthru
      _
    // Predicated region
    $region46: #{tpu_custom_call.1} parent=1 // pred_check
      _
    $region47: #{tpu_custom_call.1} parent=1 // pred_check_branch
      %1431 = sbr.rel (0) target = $region49
    $region48: #{tpu_custom_call.1} parent=1 // pred_region
      %s1433 = ssub.s32 128, 128
      %1434 = vsyncadd [#allocation7], %s1433
      %s1436 = sshll.u32 [#allocation6], 4
      %s1437 = int_to_ptr.vmem [resolvable:$true] %s1436
      %1439 = dma.vmem_to_hbm [thread:$0]  %s1437, 128, %s10, [#allocation7]
    $region49: #{tpu_custom_call.1} parent=1 // pred_fallthru
      _
    // Predicated region
    $region50: #{tpu_custom_call.1} parent=1 // pred_check
      _
    $region51: #{tpu_custom_call.1} parent=1 // pred_check_branch
      %1441 = sbr.rel (0) target = $region53
    $region52: #{tpu_custom_call.1} parent=1 // pred_region
      %1442 = dma.done [#allocation4], 128
    $region53: #{tpu_custom_call.1} parent=1 // pred_fallthru
      _
    // Predicated region
    $region54: #{tpu_custom_call.1} parent=1 // pred_check
      _
    $region55: #{tpu_custom_call.1} parent=1 // pred_check_branch
      %1444 = sbr.rel (0) target = $region57
    $region56: #{tpu_custom_call.1} parent=1 // pred_region
      %1445 = dma.done [#allocation7], 128
    $region57: #{tpu_custom_call.1} parent=1 // pred_fallthru
      _
    %1446 = vsyncpa [#allocation3], 1
    %1447 = vsyncpa [#allocation4], 1
    %1448 = vsyncpa [#allocation7], 1

</llo_original>
